<compile_context>
chip_gen: v5e
topology: v5e:2x2
jax: 0.10.0
libtpu: 0.0.40
codegen_flags: <defaults>
</compile_context>

<pallas_src>
import functools
import math

import jax
import jax.numpy as jnp
from jax.experimental import pallas as pl
from jax.experimental.pallas import tpu as pltpu

BN_EPS = 1e-5        # PyTorch BatchNorm1d default eps
HIDDEN = 16          # fc1 / fc2 width (fixed by the module)


def _vmem_limit(per_step_tile_bytes):
    """Scoped-VMEM budget: double-buffered streaming tiles + headroom."""
    need = 2 * per_step_tile_bytes + (4 << 20)
    return int(min(max(need, 16 << 20), 64 << 20))


def _pass1_kernel(x_ref, w1_ref, w2_ref, b_ref, h2_ref, stats_ref,
                  *, block_b, true_b):
    """fc1+relu+fc2+relu; write h2 (bf16) and accumulate per-feature sum/sumsq."""
    i = pl.program_id(0)

    # zero the VMEM-resident statistic accumulator on the first grid step
    @pl.when(i == 0)
    def _():
        stats_ref[...] = jnp.zeros_like(stats_ref)

    b1 = b_ref[0:1, :]                   # (1, 16) f32
    b2 = b_ref[1:2, :]                   # (1, 16) f32

    # x arrives as f32 from HBM; cast to bf16 for the MXU in-kernel.
    x = x_ref[...].astype(jnp.bfloat16)                        # (block_b, C)
    h1 = jnp.dot(x, w1_ref[...], preferred_element_type=jnp.float32) + b1
    h1 = jnp.maximum(h1, 0.0)
    h2 = jnp.dot(h1.astype(jnp.bfloat16), w2_ref[...],
                 preferred_element_type=jnp.float32) + b2
    h2 = jnp.maximum(h2, 0.0)                                  # (block_b, 16) f32

    h2_ref[...] = h2.astype(jnp.bfloat16)   # crosses HBM in bf16 to pass 2

    # batch statistics from the f32 h2; mask rows past the true batch size
    # (partial last tile reads stale/garbage rows -- they must not contribute).
    row = i * block_b + jax.lax.broadcasted_iota(jnp.int32, (block_b, 1), 0)
    h2m = jnp.where(row < true_b, h2, 0.0)
    psum = jnp.sum(h2m, axis=0, keepdims=True)                 # (1, 16)
    pssq = jnp.sum(h2m * h2m, axis=0, keepdims=True)           # (1, 16)
    stats_ref[...] += jnp.concatenate([psum, pssq], axis=0)    # (2, 16)


def _pass2_kernel(h2_ref, w4_ref, c_ref, o_ref):
    """y = h2 @ W4' + const'   (BatchNorm already folded into W4'/const')."""
    y = jnp.dot(h2_ref[...], w4_ref[...],
                preferred_element_type=jnp.float32) + c_ref[...]
    o_ref[...] = y.astype(o_ref.dtype)


@functools.partial(jax.jit, static_argnames=("block_b",))
def mlp_net_forward(x, params, *, block_b=8192):
    """MLP_Net forward. x: (B, C) f32 -> (B, n_classes) f32."""
    w1, b1, w2, b2, gamma, beta, w4, b4 = params
    B, C = x.shape
    n_classes = w4.shape[1]

    # batch tile: multiple of 16 (bf16 sublane packing for h2); no wrapper pad,
    # the last (possibly partial) block is handled by Pallas + the row mask.
    block_b = int(max(16, min(block_b, pl.cdiv(B, 16) * 16)))
    grid = (pl.cdiv(B, block_b),)

    # bf16 MXU operands for the resident weights; all elementwise math is f32.
    w1b = w1.astype(jnp.bfloat16)
    w2b = w2.astype(jnp.bfloat16)
    bias12 = jnp.stack([b1, b2], axis=0)                       # (2, 16) f32

    # ---------------- pass 1: fc1 + fc2 + batch statistics ----------------
    vmem1 = _vmem_limit(block_b * (C * 4 + HIDDEN * 2))
    h2, stats = pl.pallas_call(
        functools.partial(_pass1_kernel, block_b=block_b, true_b=B),
        grid=grid,
        in_specs=[
            pl.BlockSpec((block_b, C), lambda i: (i, 0)),      # x tile (f32)
            pl.BlockSpec((C, HIDDEN), lambda i: (0, 0)),       # W1 (resident)
            pl.BlockSpec((HIDDEN, HIDDEN), lambda i: (0, 0)),  # W2 (resident)
            pl.BlockSpec((2, HIDDEN), lambda i: (0, 0)),       # b1/b2 packed
        ],
        out_specs=[
            pl.BlockSpec((block_b, HIDDEN), lambda i: (i, 0)), # h2 tile (bf16)
            pl.BlockSpec((2, HIDDEN), lambda i: (0, 0)),       # sum/sumsq acc
        ],
        out_shape=[
            jax.ShapeDtypeStruct((B, HIDDEN), jnp.bfloat16),
            jax.ShapeDtypeStruct((2, HIDDEN), jnp.float32),
        ],
        compiler_params=pltpu.CompilerParams(
            dimension_semantics=("arbitrary",),   # stats accumulate across tiles
            vmem_limit_bytes=vmem1),
    )(x, w1b, w2b, bias12)

    # -------- tiny (16,)-sized fold: BatchNorm folded into fc4 --------
    inv_n = 1.0 / B
    mean = stats[0] * inv_n
    var = jnp.maximum(stats[1] * inv_n - mean * mean, 0.0)     # clamp: no negatives
    scale = gamma * jax.lax.rsqrt(var + BN_EPS)
    w4p = (w4 * scale[:, None]).astype(jnp.bfloat16)           # (16, n_classes)
    yconst = ((beta - mean * scale) @ w4 + b4).reshape(1, n_classes)

    # ---------------- pass 2: y = h2 @ W4' + const' ----------------
    vmem2 = _vmem_limit(block_b * (HIDDEN * 2 + n_classes * 4))
    y = pl.pallas_call(
        _pass2_kernel,
        grid=grid,
        in_specs=[
            pl.BlockSpec((block_b, HIDDEN), lambda i: (i, 0)),     # h2 tile
            pl.BlockSpec((HIDDEN, n_classes), lambda i: (0, 0)),   # W4' (resident)
            pl.BlockSpec((1, n_classes), lambda i: (0, 0)),        # const'
        ],
        out_specs=pl.BlockSpec((block_b, n_classes), lambda i: (i, 0)),
        out_shape=jax.ShapeDtypeStruct((B, n_classes), jnp.float32),
        compiler_params=pltpu.CompilerParams(
            dimension_semantics=("parallel",),    # independent tiles (2 TCs on v7x)
            vmem_limit_bytes=vmem2),
    )(h2, w4p, yconst)

    return y


def init_params(key, input_channels, n_classes):
    """Matches MLP_Net.weight_init: kaiming_normal_ (fan_in, gain=sqrt(2)) on
    Linear weights, zero biases; BatchNorm affine gamma=1, beta=0."""
    k1, k2, k4 = jax.random.split(key, 3)

    def kaiming(k, fan_in, fan_out):
        std = math.sqrt(2.0 / fan_in)
        w = jax.random.normal(k, (fan_out, fan_in), jnp.float32) * std
        return w.T                                  # stored (in, out) for x @ W

    w1 = kaiming(k1, input_channels, HIDDEN)
    b1 = jnp.zeros((HIDDEN,), jnp.float32)
    w2 = kaiming(k2, HIDDEN, HIDDEN)
    b2 = jnp.zeros((HIDDEN,), jnp.float32)
    gamma = jnp.ones((HIDDEN,), jnp.float32)
    beta = jnp.zeros((HIDDEN,), jnp.float32)
    w4 = kaiming(k4, HIDDEN, n_classes)
    b4 = jnp.zeros((n_classes,), jnp.float32)
    return (w1, b1, w2, b2, gamma, beta, w4, b4)


def mlp_net_reference(x, params):
    """Pure-JAX reference replicating the kernel's bf16 quantization points."""
    w1, b1, w2, b2, gamma, beta, w4, b4 = params
    bf, f32 = jnp.bfloat16, jnp.float32
    h1 = jnp.maximum(
        jnp.dot(x.astype(bf), w1.astype(bf), preferred_element_type=f32) + b1, 0.0)
    h2 = jnp.maximum(
        jnp.dot(h1.astype(bf), w2.astype(bf), preferred_element_type=f32) + b2, 0.0)
    n = x.shape[0]
    mean = jnp.sum(h2, axis=0) / n                      # stats from f32 h2
    var = jnp.maximum(jnp.sum(h2 * h2, axis=0) / n - mean * mean, 0.0)
    scale = gamma * jax.lax.rsqrt(var + BN_EPS)
    w4p = (w4 * scale[:, None]).astype(bf)
    yconst = (beta - mean * scale) @ w4 + b4
    h2_bf = h2.astype(bf)                               # h2 crosses HBM in bf16
    return jnp.dot(h2_bf, w4p, preferred_element_type=f32) + yconst


if __name__ == "__main__":
    key = jax.random.PRNGKey(0)
    kx, kp = jax.random.split(key)

    batch = 1000            # deliberately NOT a multiple of the tile (ragged last tile)
    input_channels = 32
    n_classes = 10

    x = jax.random.normal(kx, (batch, input_channels), dtype=jnp.float32)
    params = init_params(kp, input_channels, n_classes)

    out = jax.block_until_ready(mlp_net_forward(x, params, block_b=256))
    ref = mlp_net_reference(x, params)

    assert out.shape == (batch, n_classes)
    max_err = float(jnp.max(jnp.abs(out - ref)))
    assert bool(jnp.allclose(out, ref, atol=2e-2, rtol=2e-2)), (
        f"mismatch vs JAX reference (max abs err = {max_err})")

    print("KERNEL_OK")
</pallas_src>

<mosaic_0001>
module attributes {stable_mosaic.version = 11 : i64} {
  func.func @_pass1_kernel(%arg0: i32, %arg1: memref<256x32xf32, #tpu.memory_space<vmem>>, %arg2: memref<32x16xbf16, #tpu.memory_space<vmem>>, %arg3: memref<16x16xbf16, #tpu.memory_space<vmem>>, %arg4: memref<2x16xf32, #tpu.memory_space<vmem>>, %arg5: memref<256x16xbf16, #tpu.memory_space<vmem>>, %arg6: memref<2x16xf32, #tpu.memory_space<vmem>>) attributes {dimension_semantics = [#tpu.dimension_semantics<arbitrary>], iteration_bounds = array<i64: 4>, scalar_prefetch = 0 : i64, scratch_operands = 0 : i64, tpu.core_type = #tpu.core_type<tc>, window_params = [{transform_indices = @transform_0, window_bounds = array<i64: 256, 32>}, {pipeline_mode = #tpu.pipeline_mode<synchronous>, transform_indices = @transform_1, window_bounds = array<i64: 32, 16>}, {pipeline_mode = #tpu.pipeline_mode<synchronous>, transform_indices = @transform_2, window_bounds = array<i64: 16, 16>}, {pipeline_mode = #tpu.pipeline_mode<synchronous>, transform_indices = @transform_3, window_bounds = array<i64: 2, 16>}, {transform_indices = @transform_4, window_bounds = array<i64: 256, 16>}, {pipeline_mode = #tpu.pipeline_mode<synchronous>, transform_indices = @transform_5, window_bounds = array<i64: 2, 16>}]} {
    %c0_i32 = arith.constant 0 : i32
    %0 = arith.cmpi eq, %arg0, %c0_i32 : i32
    %1 = arith.extui %0 : i1 to i32
    %c0_i32_0 = arith.constant 0 : i32
    %2 = arith.cmpi ne, %1, %c0_i32_0 : i32
    scf.if %2 {
      %cst_21 = arith.constant 0.000000e+00 : f32
      %41 = vector.broadcast %cst_21 : f32 to vector<2x16xf32>
      %c0_22 = arith.constant 0 : index
      %c0_23 = arith.constant 0 : index
      %42 = vector.load %arg6[%c0_22, %c0_23] : memref<2x16xf32, #tpu.memory_space<vmem>>, vector<2x16xf32>
      tpu.vector_store %arg6[%c0_22, %c0_23], %41 {strides = array<i32>} : memref<2x16xf32, #tpu.memory_space<vmem>>, vector<2x16xf32>,
    } else {
    }
    %c0 = arith.constant 0 : index
    %c0_1 = arith.constant 0 : index
    %3 = vector.load %arg4[%c0, %c0_1] : memref<2x16xf32, #tpu.memory_space<vmem>>, vector<1x16xf32>
    %c1 = arith.constant 1 : index
    %c0_2 = arith.constant 0 : index
    %4 = vector.load %arg4[%c1, %c0_2] : memref<2x16xf32, #tpu.memory_space<vmem>>, vector<1x16xf32>
    %c0_3 = arith.constant 0 : index
    %c0_4 = arith.constant 0 : index
    %5 = vector.load %arg1[%c0_3, %c0_4] : memref<256x32xf32, #tpu.memory_space<vmem>>, vector<256x32xf32>
    %6 = arith.truncf %5 : vector<256x32xf32> to vector<256x32xbf16>
    %c0_5 = arith.constant 0 : index
    %c0_6 = arith.constant 0 : index
    %7 = vector.load %arg2[%c0_5, %c0_6] : memref<32x16xbf16, #tpu.memory_space<vmem>>, vector<32x16xbf16>
    %cst = arith.constant dense<0.000000e+00> : vector<256x16xf32>
    %8 = tpu.matmul %6, %7, %cst {dimension_numbers = #tpu.dot_dimension_numbers<[1], [0], [0], [1], [0, 0, 1, 1], [], []>} : vector<256x32xbf16>, vector<32x16xbf16>, vector<256x16xf32> -> vector<256x16xf32>
    %9 = vector.broadcast %3 : vector<1x16xf32> to vector<256x16xf32>
    %10 = arith.addf %8, %9 : vector<256x16xf32>
    %cst_7 = arith.constant 0.000000e+00 : f32
    %11 = vector.broadcast %cst_7 : f32 to vector<256x16xf32>
    %12 = arith.maximumf %10, %11 : vector<256x16xf32>
    %13 = arith.truncf %12 : vector<256x16xf32> to vector<256x16xbf16>
    %c0_8 = arith.constant 0 : index
    %c0_9 = arith.constant 0 : index
    %14 = vector.load %arg3[%c0_8, %c0_9] : memref<16x16xbf16, #tpu.memory_space<vmem>>, vector<16x16xbf16>
    %cst_10 = arith.constant dense<0.000000e+00> : vector<256x16xf32>
    %15 = tpu.matmul %13, %14, %cst_10 {dimension_numbers = #tpu.dot_dimension_numbers<[1], [0], [0], [1], [0, 0, 1, 1], [], []>} : vector<256x16xbf16>, vector<16x16xbf16>, vector<256x16xf32> -> vector<256x16xf32>
    %16 = vector.broadcast %4 : vector<1x16xf32> to vector<256x16xf32>
    %17 = arith.addf %15, %16 : vector<256x16xf32>
    %cst_11 = arith.constant 0.000000e+00 : f32
    %18 = vector.broadcast %cst_11 : f32 to vector<256x16xf32>
    %19 = arith.maximumf %17, %18 : vector<256x16xf32>
    %20 = arith.truncf %19 : vector<256x16xf32> to vector<256x16xbf16>
    %c0_12 = arith.constant 0 : index
    %c0_13 = arith.constant 0 : index
    %21 = vector.load %arg5[%c0_12, %c0_13] : memref<256x16xbf16, #tpu.memory_space<vmem>>, vector<256x16xbf16>
    tpu.vector_store %arg5[%c0_12, %c0_13], %20 {strides = array<i32>} : memref<256x16xbf16, #tpu.memory_space<vmem>>, vector<256x16xbf16>,
    %c256_i32 = arith.constant 256 : i32
    %22 = arith.muli %arg0, %c256_i32 : i32
    %23 = tpu.iota {dimensions = array<i32: 0>} : vector<256x1xi32>
    %24 = vector.broadcast %22 : i32 to vector<256x1xi32>
    %25 = arith.addi %24, %23 : vector<256x1xi32>
    %c1000_i32 = arith.constant 1000 : i32
    %26 = vector.broadcast %c1000_i32 : i32 to vector<256x1xi32>
    %27 = arith.cmpi slt, %25, %26 : vector<256x1xi32>
    %cst_14 = arith.constant 0.000000e+00 : f32
    %28 = vector.shape_cast %27 : vector<256x1xi1> to vector<256x1xi1>
    %29 = vector.broadcast %28 : vector<256x1xi1> to vector<256x16xi1>
    %30 = vector.broadcast %cst_14 : f32 to vector<256x16xf32>
    %31 = arith.select %29, %19, %30 : vector<256x16xi1>, vector<256x16xf32>
    %cst_15 = arith.constant dense<0.000000e+00> : vector<16xf32>
    %32 = vector.multi_reduction <add>, %31, %cst_15 [0] : vector<256x16xf32> to vector<16xf32>
    %33 = vector.shape_cast %32 : vector<16xf32> to vector<1x16xf32>
    %34 = arith.mulf %31, %31 : vector<256x16xf32>
    %cst_16 = arith.constant dense<0.000000e+00> : vector<16xf32>
    %35 = vector.multi_reduction <add>, %34, %cst_16 [0] : vector<256x16xf32> to vector<16xf32>
    %36 = vector.shape_cast %35 : vector<16xf32> to vector<1x16xf32>
    %c0_17 = arith.constant 0 : index
    %c0_18 = arith.constant 0 : index
    %37 = vector.load %arg6[%c0_17, %c0_18] : memref<2x16xf32, #tpu.memory_space<vmem>>, vector<2x16xf32>
    %38 = tpu.concatenate %33, %36 in 0 : vector<1x16xf32>, vector<1x16xf32> -> vector<2x16xf32>
    %39 = arith.addf %37, %38 : vector<2x16xf32>
    %c0_19 = arith.constant 0 : index
    %c0_20 = arith.constant 0 : index
    %40 = vector.load %arg6[%c0_19, %c0_20] : memref<2x16xf32, #tpu.memory_space<vmem>>, vector<2x16xf32>
    tpu.vector_store %arg6[%c0_19, %c0_20], %39 {strides = array<i32>} : memref<2x16xf32, #tpu.memory_space<vmem>>, vector<2x16xf32>,
    return
  }
  func.func @transform_0(%arg0: i32) -> (i32, i32) {
    %c0_i32 = arith.constant 0 : i32
    %c0_i32_0 = arith.constant 0 : i32
    return %arg0, %c0_i32 : i32, i32
  }
  func.func @transform_1(%arg0: i32) -> (i32, i32) {
    %c0_i32 = arith.constant 0 : i32
    %c0_i32_0 = arith.constant 0 : i32
    %c0_i32_1 = arith.constant 0 : i32
    return %c0_i32, %c0_i32_0 : i32, i32
  }
  func.func @transform_2(%arg0: i32) -> (i32, i32) {
    %c0_i32 = arith.constant 0 : i32
    %c0_i32_0 = arith.constant 0 : i32
    %c0_i32_1 = arith.constant 0 : i32
    return %c0_i32, %c0_i32_0 : i32, i32
  }
  func.func @transform_3(%arg0: i32) -> (i32, i32) {
    %c0_i32 = arith.constant 0 : i32
    %c0_i32_0 = arith.constant 0 : i32
    %c0_i32_1 = arith.constant 0 : i32
    return %c0_i32, %c0_i32_0 : i32, i32
  }
  func.func @transform_4(%arg0: i32) -> (i32, i32) {
    %c0_i32 = arith.constant 0 : i32
    %c0_i32_0 = arith.constant 0 : i32
    return %arg0, %c0_i32 : i32, i32
  }
  func.func @transform_5(%arg0: i32) -> (i32, i32) {
    %c0_i32 = arith.constant 0 : i32
    %c0_i32_0 = arith.constant 0 : i32
    %c0_i32_1 = arith.constant 0 : i32
    return %c0_i32, %c0_i32_0 : i32, i32
  }
}

module attributes {stable_mosaic.version = 11 : i64} {
  func.func @_pass2_kernel(%arg0: i32, %arg1: memref<256x16xbf16, #tpu.memory_space<vmem>>, %arg2: memref<16x10xbf16, #tpu.memory_space<vmem>>, %arg3: memref<1x10xf32, #tpu.memory_space<vmem>>, %arg4: memref<256x10xf32, #tpu.memory_space<vmem>>) attributes {dimension_semantics = [#tpu.dimension_semantics<parallel>], iteration_bounds = array<i64: 4>, scalar_prefetch = 0 : i64, scratch_operands = 0 : i64, tpu.core_type = #tpu.core_type<tc>, window_params = [{transform_indices = @transform_0, window_bounds = array<i64: 256, 16>}, {pipeline_mode = #tpu.pipeline_mode<synchronous>, transform_indices = @transform_1, window_bounds = array<i64: 16, 10>}, {pipeline_mode = #tpu.pipeline_mode<synchronous>, transform_indices = @transform_2, window_bounds = array<i64: 1, 10>}, {transform_indices = @transform_3, window_bounds = array<i64: 256, 10>}]} {
    %c0 = arith.constant 0 : index
    %c0_0 = arith.constant 0 : index
    %0 = vector.load %arg1[%c0, %c0_0] : memref<256x16xbf16, #tpu.memory_space<vmem>>, vector<256x16xbf16>
    %c0_1 = arith.constant 0 : index
    %c0_2 = arith.constant 0 : index
    %1 = vector.load %arg2[%c0_1, %c0_2] : memref<16x10xbf16, #tpu.memory_space<vmem>>, vector<16x10xbf16>
    %cst = arith.constant dense<0.000000e+00> : vector<256x10xf32>
    %2 = tpu.matmul %0, %1, %cst {dimension_numbers = #tpu.dot_dimension_numbers<[1], [0], [0], [1], [0, 0, 1, 1], [], []>} : vector<256x16xbf16>, vector<16x10xbf16>, vector<256x10xf32> -> vector<256x10xf32>
    %c0_3 = arith.constant 0 : index
    %c0_4 = arith.constant 0 : index
    %3 = vector.load %arg3[%c0_3, %c0_4] : memref<1x10xf32, #tpu.memory_space<vmem>>, vector<1x10xf32>
    %4 = vector.broadcast %3 : vector<1x10xf32> to vector<256x10xf32>
    %5 = arith.addf %2, %4 : vector<256x10xf32>
    %c0_5 = arith.constant 0 : index
    %c0_6 = arith.constant 0 : index
    %6 = vector.load %arg4[%c0_5, %c0_6] : memref<256x10xf32, #tpu.memory_space<vmem>>, vector<256x10xf32>
    tpu.vector_store %arg4[%c0_5, %c0_6], %5 {strides = array<i32>} : memref<256x10xf32, #tpu.memory_space<vmem>>, vector<256x10xf32>,
    return
  }
  func.func @transform_0(%arg0: i32) -> (i32, i32) {
    %c0_i32 = arith.constant 0 : i32
    %c0_i32_0 = arith.constant 0 : i32
    return %arg0, %c0_i32 : i32, i32
  }
  func.func @transform_1(%arg0: i32) -> (i32, i32) {
    %c0_i32 = arith.constant 0 : i32
    %c0_i32_0 = arith.constant 0 : i32
    %c0_i32_1 = arith.constant 0 : i32
    return %c0_i32, %c0_i32_0 : i32, i32
  }
  func.func @transform_2(%arg0: i32) -> (i32, i32) {
    %c0_i32 = arith.constant 0 : i32
    %c0_i32_0 = arith.constant 0 : i32
    %c0_i32_1 = arith.constant 0 : i32
    return %c0_i32, %c0_i32_0 : i32, i32
  }
  func.func @transform_3(%arg0: i32) -> (i32, i32) {
    %c0_i32 = arith.constant 0 : i32
    %c0_i32_0 = arith.constant 0 : i32
    return %arg0, %c0_i32 : i32, i32
  }
}

</mosaic_0001>

<llo_original>
// kernel: mlp_net_forward.3
$region0: #{mlp_net_forward.3}
  #allocation0 [shape = 'u32[]', space=smem, size = 0x4, offset = 0x4, fixed_abs, tag = 'smem constant byte address 0x4 - core index']
  #allocation1 [shape = 'u32[72,128]{1,0:T(1,128)}', space=vmem, size = 0x9000, scoped, tag = 'internal scratch']
  %s0 = inlined_call_operand.vmem [shape: bf16[1000,16], index: 0, kind: input, shape index: {}]
  %s1 = inlined_call_operand.vmem [shape: bf16[16,10], index: 1, kind: input, shape index: {}]
  %s2 = inlined_call_operand.vmem [shape: f32[1,10], index: 2, kind: input, shape index: {}]
  %s3 = inlined_call_operand.vmem [shape: f32[1000,10], index: 3, kind: output, shape index: {}]
  %s4 = sld [smem:[#allocation0]]
  $region93: #{mlp_net_forward.3} parent=0
    _
  %s6 = ssub.s32 1, %s4
  %s7 = scalar_select 0, %s6, %s4
  $region1: #{mlp_net_forward.3} parent=0
    #allocation2 [shape = 'u8[262144]{0}', space=vmem, size = 0x40000, scoped, tag = 'output window, operand 0']
    loop: start=0, step=1, limit=6
    $region2: #{mlp_net_forward.3} parent=1 // loop_pre_header
      _
    $region3: #{mlp_net_forward.3} parent=1 // loop_header
      %s9 = sphi 0, %s13
      %p10 = scmp.ge.s32.totalorder %s9, 6
      %s19 = sphi 0, %s21
      %s22 = sphi 0, %s19
      %s23 = sphi 0, %s22
      %s39 = sphi 0, %s23
      %s43 = sphi 0, %s43
      %s45 = sphi 0, %s43
      %s46 = sphi 0, %s45
      %s60 = sphi 0, %s46
      %s64 = sphi 0, %s64
      %s66 = sphi 0, %s64
      %s67 = sphi 0, %s66
      %s81 = sphi 0, %s67
      %s87 = sphi 0, %s89
      %s90 = sphi 0, %s87
      %s91 = sphi 0, %s90
      %s107 = sphi 0, %s91
    $region4: #{mlp_net_forward.3} parent=1 // loop_header_branch
      %12 = sbr.rel (%p10) target = $region8
    $region5: #{mlp_net_forward.3} parent=1 // loop_body
      %s14 = ssub.s32 %s9, 1
      %s15 = ssub.s32 %s9, 2
      %s16 = sadd.s32 %s9, 1
      %s17 = ssub.s32 %s9, %s16
      %p18 = scmp.eq.s32.totalorder %s17, 0
      %s20 = sadd.s32 %s19, 1
      %s21 = scalar_select %p18, %s19, %s20
      %p24 = pneg %p18
      %p25 = scmp.eq.s32.totalorder %s9, 3
      %p26 = por %p24, %p25
      %p27 = scmp.ne.s32.totalorder %s19, %s22
      %p28 = scmp.eq.s32.totalorder %s9, 0
      %p29 = por %p27, %p28
      %p30 = scmp.ne.s32.totalorder %s19, %s22
      %p31 = scmp.eq.s32.totalorder %s14, 3
      %p32 = por %p30, %p31
      %p33 = scmp.ne.s32.totalorder %s22, %s23
      %p34 = scmp.eq.s32.totalorder %s14, 0
      %p35 = por %p33, %p34
      %p36 = scmp.ne.s32.totalorder %s22, %s23
      %p37 = scmp.eq.s32.totalorder %s15, 3
      %p38 = por %p36, %p37
      %p40 = scmp.ne.s32.totalorder %s23, %s39
      %p41 = scmp.eq.s32.totalorder %s15, 0
      %p42 = por %p40, %p41
      %s44 = sadd.s32 %s43, 1
      %p47 = scmp.eq.s32.totalorder %s9, 3
      %p48 = scmp.ne.s32.totalorder %s43, %s45
      %p49 = scmp.eq.s32.totalorder %s9, 0
      %p50 = por %p48, %p49
      %p51 = scmp.ne.s32.totalorder %s43, %s45
      %p52 = scmp.eq.s32.totalorder %s14, 3
      %p53 = por %p51, %p52
      %p54 = scmp.ne.s32.totalorder %s45, %s46
      %p55 = scmp.eq.s32.totalorder %s14, 0
      %p56 = por %p54, %p55
      %p57 = scmp.ne.s32.totalorder %s45, %s46
      %p58 = scmp.eq.s32.totalorder %s15, 3
      %p59 = por %p57, %p58
      %p61 = scmp.ne.s32.totalorder %s46, %s60
      %p62 = scmp.eq.s32.totalorder %s15, 0
      %p63 = por %p61, %p62
      %s65 = sadd.s32 %s64, 1
      %p68 = scmp.eq.s32.totalorder %s9, 3
      %p69 = scmp.ne.s32.totalorder %s64, %s66
      %p70 = scmp.eq.s32.totalorder %s9, 0
      %p71 = por %p69, %p70
      %p72 = scmp.ne.s32.totalorder %s64, %s66
      %p73 = scmp.eq.s32.totalorder %s14, 3
      %p74 = por %p72, %p73
      %p75 = scmp.ne.s32.totalorder %s66, %s67
      %p76 = scmp.eq.s32.totalorder %s14, 0
      %p77 = por %p75, %p76
      %p78 = scmp.ne.s32.totalorder %s66, %s67
      %p79 = scmp.eq.s32.totalorder %s15, 3
      %p80 = por %p78, %p79
      %p82 = scmp.ne.s32.totalorder %s67, %s81
      %p83 = scmp.eq.s32.totalorder %s15, 0
      %p84 = por %p82, %p83
      %s85 = ssub.s32 %s9, %s16
      %p86 = scmp.eq.s32.totalorder %s85, 0
      %s88 = sadd.s32 %s87, 1
      %s89 = scalar_select %p86, %s87, %s88
      %p92 = pneg %p86
      %p93 = scmp.eq.s32.totalorder %s9, 3
      %p94 = por %p92, %p93
      %p95 = scmp.ne.s32.totalorder %s87, %s90
      %p96 = scmp.eq.s32.totalorder %s9, 0
      %p97 = por %p95, %p96
      %p98 = scmp.ne.s32.totalorder %s87, %s90
      %p99 = scmp.eq.s32.totalorder %s14, 3
      %p100 = por %p98, %p99
      %p101 = scmp.ne.s32.totalorder %s90, %s91
      %p102 = scmp.eq.s32.totalorder %s14, 0
      %p103 = por %p101, %p102
      %p104 = scmp.ne.s32.totalorder %s90, %s91
      %p105 = scmp.eq.s32.totalorder %s15, 3
      %p106 = por %p104, %p105
      %p108 = scmp.ne.s32.totalorder %s91, %s107
      %p109 = scmp.eq.s32.totalorder %s15, 0
      %p110 = por %p108, %p109
      %p111 = scmp.le.s32.totalorder 1, %s9
      %p112 = scmp.lt.s32.totalorder %s9, 5
      %p113 = pnand %p111, %p112
      %p114 = pneg %p113
      // Predicated region
      $region9: #{mlp_net_forward.3} parent=5 // pred_check
        _
      $region10: #{mlp_net_forward.3} parent=5 // pred_check_branch
        %116 = sbr.rel (%p113) target = $region12
      $region11: #{mlp_net_forward.3} parent=5 // pred_region
        %s117 = ssub.s32 %s9, 1
        // Predicated region
        $region13: #{mlp_net_forward.3} parent=11 // pred_check
          %p118 = pneg %p56
        $region14: #{mlp_net_forward.3} parent=11 // pred_check_branch
          %120 = sbr.rel (%p118) target = $region16
        $region15: #{mlp_net_forward.3} parent=11 // pred_region
          _
        $region16: #{mlp_net_forward.3} parent=11 // pred_fallthru
          _
        // Predicated region
        $region17: #{mlp_net_forward.3} parent=11 // pred_check
          %p121 = pneg %p77
        $region18: #{mlp_net_forward.3} parent=11 // pred_check_branch
          %123 = sbr.rel (%p121) target = $region20
        $region19: #{mlp_net_forward.3} parent=11 // pred_region
          _
        $region20: #{mlp_net_forward.3} parent=11 // pred_fallthru
          _
      $region12: #{mlp_net_forward.3} parent=5 // pred_fallthru
        _
      %p124 = scmp.lt.s32.totalorder %s9, 4
      // Predicated region
      $region21: #{mlp_net_forward.3} parent=5 // pred_check
        %p125 = pneg %p124
      $region22: #{mlp_net_forward.3} parent=5 // pred_check_branch
        %127 = sbr.rel (%p125) target = $region24
      $region23: #{mlp_net_forward.3} parent=5 // pred_region
        // Predicated region
        $region25: #{mlp_net_forward.3} parent=23 // pred_check
          %p128 = pneg %p29
        $region26: #{mlp_net_forward.3} parent=23 // pred_check_branch
          %130 = sbr.rel (%p128) target = $region28
        $region27: #{mlp_net_forward.3} parent=23 // pred_region
          %s131 = smul.u32 32, %s9
          %s132 = ssub.s32 125, %s131
          %p133 = scmp.lt.s32.totalorder %s132, 32
          %s134 = scalar_select %p133, %s132, 32
          %s135 = smul.u32 4, %s134
          %p136 = scmp.lt.s32.totalorder %s131, 124
          %s137 = scalar_select %p136, %s131, 124
          %s138 = smul.addr %s137, 4
          %s139 = scalar_lea.vmem %s0, %s138
          %s140 = smul.u32 32, %s9
          %s141 = ssub.s32 125, %s140
          %p142 = scmp.lt.s32.totalorder %s141, 32
          %s143 = scalar_select %p142, %s141, 32
          %s144 = smul.u32 4, %s143
        $region28: #{mlp_net_forward.3} parent=23 // pred_fallthru
          _
      $region24: #{mlp_net_forward.3} parent=5 // pred_fallthru
        _
      %p145 = scmp.le.s32.totalorder 1, %s9
      %p146 = scmp.lt.s32.totalorder %s9, 5
      %p147 = pnand %p145, %p146
      %p148 = pneg %p147
      // Predicated region
      $region29: #{mlp_net_forward.3} parent=5 // pred_check
        _
      $region30: #{mlp_net_forward.3} parent=5 // pred_check_branch
        %150 = sbr.rel (%p147) target = $region32
      $region31: #{mlp_net_forward.3} parent=5 // pred_region
        %s151 = ssub.s32 %s9, 1
        %s152 = smul.u32 32, %s14
        %s153 = ssub.s32 125, %s152
        %p154 = scmp.lt.s32.totalorder %s153, 32
        %s155 = scalar_select %p154, %s153, 32
        %s156 = smul.u32 4, %s155
        %p157 = scmp.lt.s32.totalorder %s152, 124
        %s158 = scalar_select %p157, %s152, 124
        %s159 = smul.addr %s158, 4
        %s160 = scalar_lea.vmem %s0, %s159
        %p161 = pneg %p35
        %p162 = pneg %p32
        %p163 = pneg %p56
        %p164 = pneg %p53
        %p165 = pneg %p77
        %p166 = pneg %p74
        %p167 = pneg %p103
        %p168 = pneg %p100
        %s169 = sand.u32 %s90, 1
        %s170 = sand.u32 %s90, 1
        %s171 = smul.addr %s170, 256
        %s172 = scalar_lea.vmem [#allocation2], %s171
        %s173 = smul.u32 32, %s14
        %s174 = ssub.s32 125, %s173
        %p175 = scmp.lt.s32.totalorder %s174, 32
        %s176 = scalar_select %p175, %s174, 32
        %s177 = smul.u32 4, %s176
        %p178 = scmp.lt.s32.totalorder %s173, 124
        %s179 = scalar_select %p178, %s173, 124
        %s180 = smul.addr %s179, 4
        %s181 = scalar_lea.vmem %s0, %s180
        %s182 = smul.u32 32, %s14
        %s183 = ssub.s32 125, %s182
        %p184 = scmp.lt.s32.totalorder %s183, 32
        %s185 = scalar_select %p184, %s183, 32
        %s186 = smul.u32 4, %s185
        %s187 = smul.u32 32, %s14
        %s188 = ssub.s32 125, %s187
        %p189 = scmp.lt.s32.totalorder %s188, 32
        %s190 = scalar_select %p189, %s188, 32
        %s191 = smul.u32 8, %s190
        %v193 = vld [vmem:[%s181] sm:$0xf]
        %v194 = vld [vmem:[%s181 + $0x4] sm:$0xf]
        %v195 = vld [vmem:[%s181 + $0x8] sm:$0xf]
        %v196 = vld [vmem:[%s181 + $0xc] sm:$0xf]
        %v197 = vld [vmem:[%s181 + $0x10] sm:$0xf]
        %v198 = vld [vmem:[%s181 + $0x14] sm:$0xf]
        %v199 = vld [vmem:[%s181 + $0x18] sm:$0xf]
        %v200 = vld [vmem:[%s181 + $0x1c] sm:$0xf]
        %v201 = vld [vmem:[%s181 + $0x20] sm:$0xf]
        %v202 = vld [vmem:[%s181 + $0x24] sm:$0xf]
        %v203 = vld [vmem:[%s181 + $0x28] sm:$0xf]
        %v204 = vld [vmem:[%s181 + $0x2c] sm:$0xf]
        %v205 = vld [vmem:[%s181 + $0x30] sm:$0xf]
        %v206 = vld [vmem:[%s181 + $0x34] sm:$0xf]
        %v207 = vld [vmem:[%s181 + $0x38] sm:$0xf]
        %v208 = vld [vmem:[%s181 + $0x3c] sm:$0xf]
        %v209 = vld [vmem:[%s181 + $0x40] sm:$0xf]
        %v210 = vld [vmem:[%s181 + $0x44] sm:$0xf]
        %v211 = vld [vmem:[%s181 + $0x48] sm:$0xf]
        %v212 = vld [vmem:[%s181 + $0x4c] sm:$0xf]
        %v213 = vld [vmem:[%s181 + $0x50] sm:$0xf]
        %v214 = vld [vmem:[%s181 + $0x54] sm:$0xf]
        %v215 = vld [vmem:[%s181 + $0x58] sm:$0xf]
        %v216 = vld [vmem:[%s181 + $0x5c] sm:$0xf]
        %v217 = vld [vmem:[%s181 + $0x60] sm:$0xf]
        %v218 = vld [vmem:[%s181 + $0x64] sm:$0xf]
        %v219 = vld [vmem:[%s181 + $0x68] sm:$0xf]
        %v220 = vld [vmem:[%s181 + $0x6c] sm:$0xf]
        %v221 = vld [vmem:[%s181 + $0x70] sm:$0xf]
        %v222 = vld [vmem:[%s181 + $0x74] sm:$0xf]
        %v223 = vld [vmem:[%s181 + $0x78] sm:$0xf]
        %v224 = vld [vmem:[%s181 + $0x7c] sm:$0xf]
        %v225 = vld [vmem:[%s1] sm:$0xf]
        %v226 = vld [vmem:[%s1 + $0x4] sm:$0xf]
        %v227 = vld [vmem:[%s2] sm:$0x1]
        %v229 = vperm.slane %v227, 0
        %v263 = vunpack.c.l.b16 %v193
        %v264 = vunpack.c.l.b16 %v194
        %v265 = vunpack.c.l.b16 %v195
        %v266 = vunpack.c.l.b16 %v196
        %v267 = vunpack.c.l.b16 %v197
        %v268 = vunpack.c.l.b16 %v198
        %v269 = vunpack.c.l.b16 %v199
        %v270 = vunpack.c.l.b16 %v200
        %v271 = vunpack.c.l.b16 %v201
        %v272 = vunpack.c.l.b16 %v202
        %v273 = vunpack.c.l.b16 %v203
        %v274 = vunpack.c.l.b16 %v204
        %v275 = vunpack.c.l.b16 %v205
        %v276 = vunpack.c.l.b16 %v206
        %v277 = vunpack.c.l.b16 %v207
        %v278 = vunpack.c.l.b16 %v208
        %v279 = vunpack.c.l.b16 %v209
        %v280 = vunpack.c.l.b16 %v210
        %v281 = vunpack.c.l.b16 %v211
        %v282 = vunpack.c.l.b16 %v212
        %v283 = vunpack.c.l.b16 %v213
        %v284 = vunpack.c.l.b16 %v214
        %v285 = vunpack.c.l.b16 %v215
        %v286 = vunpack.c.l.b16 %v216
        %v287 = vunpack.c.l.b16 %v217
        %v288 = vunpack.c.l.b16 %v218
        %v289 = vunpack.c.l.b16 %v219
        %v290 = vunpack.c.l.b16 %v220
        %v291 = vunpack.c.l.b16 %v221
        %v292 = vunpack.c.l.b16 %v222
        %v293 = vunpack.c.l.b16 %v223
        %v294 = vunpack.c.l.b16 %v224
        %v295 = vpack.c.b16 %v264, %v263
        %v296 = vpack.c.b16 %v266, %v265
        %v297 = vpack.c.b16 %v268, %v267
        %v298 = vpack.c.b16 %v270, %v269
        %v299 = vpack.c.b16 %v272, %v271
        %v300 = vpack.c.b16 %v274, %v273
        %v301 = vpack.c.b16 %v276, %v275
        %v302 = vpack.c.b16 %v278, %v277
        %v303 = vpack.c.b16 %v280, %v279
        %v304 = vpack.c.b16 %v282, %v281
        %v305 = vpack.c.b16 %v284, %v283
        %v306 = vpack.c.b16 %v286, %v285
        %v307 = vpack.c.b16 %v288, %v287
        %v308 = vpack.c.b16 %v290, %v289
        %v309 = vpack.c.b16 %v292, %v291
        %v310 = vpack.c.b16 %v294, %v293
        %v313 = vunpack.c.l.b16 %v225
        %v314 = vunpack.c.l.b16 %v226
        %v315 = vpack.c.b16 %v314, %v313
        %vm317 = vcmask 130048
        %v319 = vsel %vm317, %v295, 0
        %v322 = vsel %vm317, %v296, 0
        %v325 = vsel %vm317, %v297, 0
        %v328 = vsel %vm317, %v298, 0
        %v331 = vsel %vm317, %v299, 0
        %v334 = vsel %vm317, %v300, 0
        %v337 = vsel %vm317, %v301, 0
        %v340 = vsel %vm317, %v302, 0
        %v343 = vsel %vm317, %v303, 0
        %v346 = vsel %vm317, %v304, 0
        %v349 = vsel %vm317, %v305, 0
        %v352 = vsel %vm317, %v306, 0
        %v355 = vsel %vm317, %v307, 0
        %v358 = vsel %vm317, %v308, 0
        %v361 = vsel %vm317, %v309, 0
        %v364 = vsel %vm317, %v310, 0
        %366 = vmatpush.bf16.msra.mxu0 0
        %367 = vmatpush.bf16.msra.mxu0 0
        %368 = vmatpush.bf16.msra.mxu0 0
        %369 = vmatpush.bf16.msra.mxu0 0
        %370 = vmatpush.bf16.msra.mxu0 0
        %371 = vmatpush.bf16.msra.mxu0 0
        %372 = vmatpush.bf16.msra.mxu0 0
        %373 = vmatpush.bf16.msra.mxu0 %v315
        %374 = vmatmul.bf16.gmra.mxu0 %v319
        %v375 = vpop.f32.mrf.mxu0
        %v376 = vadd.f32 %v229, %v375
        %v377 = vpop.f32.mrf.mxu0
        %v378 = vadd.f32 %v229, %v377
        %379 = vmatmul.bf16.gmra.mxu0 %v322
        %v380 = vpop.f32.mrf.mxu0
        %v381 = vadd.f32 %v229, %v380
        %v382 = vpop.f32.mrf.mxu0
        %v383 = vadd.f32 %v229, %v382
        %384 = vmatmul.bf16.gmra.mxu0 %v325
        %v385 = vpop.f32.mrf.mxu0
        %v386 = vadd.f32 %v229, %v385
        %v387 = vpop.f32.mrf.mxu0
        %v388 = vadd.f32 %v229, %v387
        %389 = vmatmul.bf16.gmra.mxu0 %v328
        %v390 = vpop.f32.mrf.mxu0
        %v391 = vadd.f32 %v229, %v390
        %v392 = vpop.f32.mrf.mxu0
        %v393 = vadd.f32 %v229, %v392
        %394 = vmatmul.bf16.gmra.mxu0 %v331
        %v395 = vpop.f32.mrf.mxu0
        %v396 = vadd.f32 %v229, %v395
        %v397 = vpop.f32.mrf.mxu0
        %v398 = vadd.f32 %v229, %v397
        %399 = vmatmul.bf16.gmra.mxu0 %v334
        %v400 = vpop.f32.mrf.mxu0
        %v401 = vadd.f32 %v229, %v400
        %v402 = vpop.f32.mrf.mxu0
        %v403 = vadd.f32 %v229, %v402
        %404 = vmatmul.bf16.gmra.mxu0 %v337
        %v405 = vpop.f32.mrf.mxu0
        %v406 = vadd.f32 %v229, %v405
        %v407 = vpop.f32.mrf.mxu0
        %v408 = vadd.f32 %v229, %v407
        %409 = vmatmul.bf16.gmra.mxu0 %v340
        %v410 = vpop.f32.mrf.mxu0
        %v411 = vadd.f32 %v229, %v410
        %v412 = vpop.f32.mrf.mxu0
        %v413 = vadd.f32 %v229, %v412
        %414 = vmatmul.bf16.gmra.mxu0 %v343
        %v415 = vpop.f32.mrf.mxu0
        %v416 = vadd.f32 %v229, %v415
        %v417 = vpop.f32.mrf.mxu0
        %v418 = vadd.f32 %v229, %v417
        %419 = vmatmul.bf16.gmra.mxu0 %v346
        %v420 = vpop.f32.mrf.mxu0
        %v421 = vadd.f32 %v229, %v420
        %v422 = vpop.f32.mrf.mxu0
        %v423 = vadd.f32 %v229, %v422
        %424 = vmatmul.bf16.gmra.mxu0 %v349
        %v425 = vpop.f32.mrf.mxu0
        %v426 = vadd.f32 %v229, %v425
        %v427 = vpop.f32.mrf.mxu0
        %v428 = vadd.f32 %v229, %v427
        %429 = vmatmul.bf16.gmra.mxu0 %v352
        %v430 = vpop.f32.mrf.mxu0
        %v431 = vadd.f32 %v229, %v430
        %v432 = vpop.f32.mrf.mxu0
        %v433 = vadd.f32 %v229, %v432
        %434 = vmatmul.bf16.gmra.mxu0 %v355
        %v435 = vpop.f32.mrf.mxu0
        %v436 = vadd.f32 %v229, %v435
        %v437 = vpop.f32.mrf.mxu0
        %v438 = vadd.f32 %v229, %v437
        %439 = vmatmul.bf16.gmra.mxu0 %v358
        %v440 = vpop.f32.mrf.mxu0
        %v441 = vadd.f32 %v229, %v440
        %v442 = vpop.f32.mrf.mxu0
        %v443 = vadd.f32 %v229, %v442
        %444 = vmatmul.bf16.gmra.mxu0 %v361
        %v445 = vpop.f32.mrf.mxu0
        %v446 = vadd.f32 %v229, %v445
        %v447 = vpop.f32.mrf.mxu0
        %v448 = vadd.f32 %v229, %v447
        %449 = vmatmul.bf16.gmra.mxu0 %v364
        %v450 = vpop.f32.mrf.mxu0
        %v451 = vadd.f32 %v229, %v450
        %v452 = vpop.f32.mrf.mxu0
        %v453 = vadd.f32 %v229, %v452
        %454 = vdwg.mxu0
        %vm455 = vcmask 80896
        %456 = vst.msk [vmem:[%s172] sm:$0xff] %vm455, %v376
        %457 = vst.msk [vmem:[%s172 + $0x8] sm:$0xff] %vm455, %v378
        %458 = vst.msk [vmem:[%s172 + $0x10] sm:$0xff] %vm455, %v381
        %459 = vst.msk [vmem:[%s172 + $0x18] sm:$0xff] %vm455, %v383
        %460 = vst.msk [vmem:[%s172 + $0x20] sm:$0xff] %vm455, %v386
        %461 = vst.msk [vmem:[%s172 + $0x28] sm:$0xff] %vm455, %v388
        %462 = vst.msk [vmem:[%s172 + $0x30] sm:$0xff] %vm455, %v391
        %463 = vst.msk [vmem:[%s172 + $0x38] sm:$0xff] %vm455, %v393
        %464 = vst.msk [vmem:[%s172 + $0x40] sm:$0xff] %vm455, %v396
        %465 = vst.msk [vmem:[%s172 + $0x48] sm:$0xff] %vm455, %v398
        %466 = vst.msk [vmem:[%s172 + $0x50] sm:$0xff] %vm455, %v401
        %467 = vst.msk [vmem:[%s172 + $0x58] sm:$0xff] %vm455, %v403
        %468 = vst.msk [vmem:[%s172 + $0x60] sm:$0xff] %vm455, %v406
        %469 = vst.msk [vmem:[%s172 + $0x68] sm:$0xff] %vm455, %v408
        %470 = vst.msk [vmem:[%s172 + $0x70] sm:$0xff] %vm455, %v411
        %471 = vst.msk [vmem:[%s172 + $0x78] sm:$0xff] %vm455, %v413
        %472 = vst.msk [vmem:[%s172 + $0x80] sm:$0xff] %vm455, %v416
        %473 = vst.msk [vmem:[%s172 + $0x88] sm:$0xff] %vm455, %v418
        %474 = vst.msk [vmem:[%s172 + $0x90] sm:$0xff] %vm455, %v421
        %475 = vst.msk [vmem:[%s172 + $0x98] sm:$0xff] %vm455, %v423
        %476 = vst.msk [vmem:[%s172 + $0xa0] sm:$0xff] %vm455, %v426
        %477 = vst.msk [vmem:[%s172 + $0xa8] sm:$0xff] %vm455, %v428
        %478 = vst.msk [vmem:[%s172 + $0xb0] sm:$0xff] %vm455, %v431
        %479 = vst.msk [vmem:[%s172 + $0xb8] sm:$0xff] %vm455, %v433
        %480 = vst.msk [vmem:[%s172 + $0xc0] sm:$0xff] %vm455, %v436
        %481 = vst.msk [vmem:[%s172 + $0xc8] sm:$0xff] %vm455, %v438
        %482 = vst.msk [vmem:[%s172 + $0xd0] sm:$0xff] %vm455, %v441
        %483 = vst.msk [vmem:[%s172 + $0xd8] sm:$0xff] %vm455, %v443
        %484 = vst.msk [vmem:[%s172 + $0xe0] sm:$0xff] %vm455, %v446
        %485 = vst.msk [vmem:[%s172 + $0xe8] sm:$0xff] %vm455, %v448
        %486 = vst.msk [vmem:[%s172 + $0xf0] sm:$0xff] %vm455, %v451
        %487 = vst.msk [vmem:[%s172 + $0xf8] sm:$0xff] %vm455, %v453
        %s488 = sand.u32 %s90, 1
        %s489 = sand.u32 %s90, 1
        %s490 = smul.addr %s489, 256
        %s491 = scalar_lea.vmem [#allocation2], %s490
        // Predicated region
        $region33: #{mlp_net_forward.3} parent=31 // pred_check
          %p492 = pneg %p100
        $region34: #{mlp_net_forward.3} parent=31 // pred_check_branch
          %494 = sbr.rel (%p492) target = $region36
        $region35: #{mlp_net_forward.3} parent=31 // pred_region
          %s495 = smul.u32 32, %s14
          %s496 = ssub.s32 125, %s495
          %p497 = scmp.lt.s32.totalorder %s496, 32
          %s498 = scalar_select %p497, %s496, 32
          %s499 = smul.u32 8, %s498
          %p500 = scmp.ne.s32.totalorder 0, %s499
          %s501 = smul.addr %s495, 8
          %s502 = scalar_lea.vmem %s3, %s501
          // Predicated region
          $region37: #{mlp_net_forward.3} parent=35 // pred_check
            %p503 = pneg %p500
          $region38: #{mlp_net_forward.3} parent=35 // pred_check_branch
            %505 = sbr.rel (%p503) target = $region40
          $region39: #{mlp_net_forward.3} parent=35 // pred_region
            // Predicated region
            $region41: #{mlp_net_forward.3} parent=39 // pred_check
              _
            $region42: #{mlp_net_forward.3} parent=39 // pred_check_branch
              %507 = sbr.rel (0) target = $region44
            $region43: #{mlp_net_forward.3} parent=39 // pred_region
              // Predicated region
              $region63: #{mlp_net_forward.3} parent=43 // pred_check
                _
              $region64: #{mlp_net_forward.3} parent=43 // pred_check_branch
                %619 = sbr.rel (0) target = $region66
              $region65: #{mlp_net_forward.3} parent=43 // pred_region
                %s620 = sshrl.u32 %s498, 5
                // While loop
                $region67: #{mlp_net_forward.3} parent=65 // loop_pre_header
                  _
                $region68: #{mlp_net_forward.3} parent=65 // loop_header
                  %s622 = sphi 0, %s624
                  %p623 = scmp.ge.s32.totalorder %s622, %s620
                  %s627 = sphi 0, %s696
                  %s628 = sphi %s491, %s699
                  %s629 = sphi %s502, %s700
                $region69: #{mlp_net_forward.3} parent=65 // loop_header_branch
                  %626 = sbr.rel (%p623) target = $region73
                $region70: #{mlp_net_forward.3} parent=65 // loop_body
                  %v630 = vld [vmem:[%s628] sm:$0xff]
                  %631 = vst [vmem:[%s629] sm:$0xff] %v630
                  %v632 = vld [vmem:[%s628 + $0x8] sm:$0xff]
                  %633 = vst [vmem:[%s629 + $0x8] sm:$0xff] %v632
                  %v634 = vld [vmem:[%s628 + $0x10] sm:$0xff]
                  %635 = vst [vmem:[%s629 + $0x10] sm:$0xff] %v634
                  %v636 = vld [vmem:[%s628 + $0x18] sm:$0xff]
                  %637 = vst [vmem:[%s629 + $0x18] sm:$0xff] %v636
                  %v638 = vld [vmem:[%s628 + $0x20] sm:$0xff]
                  %639 = vst [vmem:[%s629 + $0x20] sm:$0xff] %v638
                  %v640 = vld [vmem:[%s628 + $0x28] sm:$0xff]
                  %641 = vst [vmem:[%s629 + $0x28] sm:$0xff] %v640
                  %v642 = vld [vmem:[%s628 + $0x30] sm:$0xff]
                  %643 = vst [vmem:[%s629 + $0x30] sm:$0xff] %v642
                  %v644 = vld [vmem:[%s628 + $0x38] sm:$0xff]
                  %645 = vst [vmem:[%s629 + $0x38] sm:$0xff] %v644
                  %v646 = vld [vmem:[%s628 + $0x40] sm:$0xff]
                  %647 = vst [vmem:[%s629 + $0x40] sm:$0xff] %v646
                  %v648 = vld [vmem:[%s628 + $0x48] sm:$0xff]
                  %649 = vst [vmem:[%s629 + $0x48] sm:$0xff] %v648
                  %v650 = vld [vmem:[%s628 + $0x50] sm:$0xff]
                  %651 = vst [vmem:[%s629 + $0x50] sm:$0xff] %v650
                  %v652 = vld [vmem:[%s628 + $0x58] sm:$0xff]
                  %653 = vst [vmem:[%s629 + $0x58] sm:$0xff] %v652
                  %v654 = vld [vmem:[%s628 + $0x60] sm:$0xff]
                  %655 = vst [vmem:[%s629 + $0x60] sm:$0xff] %v654
                  %v656 = vld [vmem:[%s628 + $0x68] sm:$0xff]
                  %657 = vst [vmem:[%s629 + $0x68] sm:$0xff] %v656
                  %v658 = vld [vmem:[%s628 + $0x70] sm:$0xff]
                  %659 = vst [vmem:[%s629 + $0x70] sm:$0xff] %v658
                  %v660 = vld [vmem:[%s628 + $0x78] sm:$0xff]
                  %661 = vst [vmem:[%s629 + $0x78] sm:$0xff] %v660
                  %v662 = vld [vmem:[%s628 + $0x80] sm:$0xff]
                  %663 = vst [vmem:[%s629 + $0x80] sm:$0xff] %v662
                  %v664 = vld [vmem:[%s628 + $0x88] sm:$0xff]
                  %665 = vst [vmem:[%s629 + $0x88] sm:$0xff] %v664
                  %v666 = vld [vmem:[%s628 + $0x90] sm:$0xff]
                  %667 = vst [vmem:[%s629 + $0x90] sm:$0xff] %v666
                  %v668 = vld [vmem:[%s628 + $0x98] sm:$0xff]
                  %669 = vst [vmem:[%s629 + $0x98] sm:$0xff] %v668
                  %v670 = vld [vmem:[%s628 + $0xa0] sm:$0xff]
                  %671 = vst [vmem:[%s629 + $0xa0] sm:$0xff] %v670
                  %v672 = vld [vmem:[%s628 + $0xa8] sm:$0xff]
                  %673 = vst [vmem:[%s629 + $0xa8] sm:$0xff] %v672
                  %v674 = vld [vmem:[%s628 + $0xb0] sm:$0xff]
                  %675 = vst [vmem:[%s629 + $0xb0] sm:$0xff] %v674
                  %v676 = vld [vmem:[%s628 + $0xb8] sm:$0xff]
                  %677 = vst [vmem:[%s629 + $0xb8] sm:$0xff] %v676
                  %v678 = vld [vmem:[%s628 + $0xc0] sm:$0xff]
                  %679 = vst [vmem:[%s629 + $0xc0] sm:$0xff] %v678
                  %v680 = vld [vmem:[%s628 + $0xc8] sm:$0xff]
                  %681 = vst [vmem:[%s629 + $0xc8] sm:$0xff] %v680
                  %v682 = vld [vmem:[%s628 + $0xd0] sm:$0xff]
                  %683 = vst [vmem:[%s629 + $0xd0] sm:$0xff] %v682
                  %v684 = vld [vmem:[%s628 + $0xd8] sm:$0xff]
                  %685 = vst [vmem:[%s629 + $0xd8] sm:$0xff] %v684
                  %v686 = vld [vmem:[%s628 + $0xe0] sm:$0xff]
                  %687 = vst [vmem:[%s629 + $0xe0] sm:$0xff] %v686
                  %v688 = vld [vmem:[%s628 + $0xe8] sm:$0xff]
                  %689 = vst [vmem:[%s629 + $0xe8] sm:$0xff] %v688
                  %v690 = vld [vmem:[%s628 + $0xf0] sm:$0xff]
                  %691 = vst [vmem:[%s629 + $0xf0] sm:$0xff] %v690
                  %v692 = vld [vmem:[%s628 + $0xf8] sm:$0xff]
                  %693 = vst [vmem:[%s629 + $0xf8] sm:$0xff] %v692
                  %s694 = sadd.s32 1, %s627
                  %p695 = scmp.ge.s32.totalorder %s694, %s620
                  %s696 = scalar_select %p695, 0, %s694
                  %s697 = smul.u32 %s696, 256
                  %s698 = smul.u32 %s696, 256
                  %s699 = scalar_lea.vmem %s491, %s697 [#allocation2]
                  %s700 = scalar_lea.vmem %s502, %s698
                $region71: #{mlp_net_forward.3} parent=65 // loop_footer
                  %s624 = sadd.s32 %s622, 1
                $region72: #{mlp_net_forward.3} parent=65 // loop_footer_branch
                  %621 = sbr.rel target = $region68
                $region73: #{mlp_net_forward.3} parent=65 // loop_exit
                  _
                %s701 = sshrl.u32 %s498, 5
                %s702 = sand.u32 %s498, 31
                %s703 = smul.u32 %s701, 32
                %s704 = smul.u32 8, %s703
                %s705 = scalar_lea.vmem %s491, %s704 [#allocation2]
                %s706 = smul.u32 8, %s703
                %s707 = scalar_lea.vmem %s502, %s706
                // While loop
                $region74: #{mlp_net_forward.3} parent=65 // loop_pre_header
                  _
                $region75: #{mlp_net_forward.3} parent=65 // loop_header
                  %s709 = sphi 0, %s711
                  %p710 = scmp.ge.s32.totalorder %s709, %s702
                  %s714 = sphi 0, %s721
                  %s715 = sphi %s705, %s724
                  %s716 = sphi %s707, %s725
                $region76: #{mlp_net_forward.3} parent=65 // loop_header_branch
                  %713 = sbr.rel (%p710) target = $region80
                $region77: #{mlp_net_forward.3} parent=65 // loop_body
                  %v717 = vld [vmem:[%s715] sm:$0xff]
                  %718 = vst [vmem:[%s716] sm:$0xff] %v717
                  %s719 = sadd.s32 1, %s714
                  %p720 = scmp.ge.s32.totalorder %s719, %s702
                  %s721 = scalar_select %p720, 0, %s719
                  %s722 = smul.u32 %s721, 8
                  %s723 = smul.u32 %s721, 8
                  %s724 = scalar_lea.vmem %s705, %s722 [#allocation2]
                  %s725 = scalar_lea.vmem %s707, %s723
                $region78: #{mlp_net_forward.3} parent=65 // loop_footer
                  %s711 = sadd.s32 %s709, 1
                $region79: #{mlp_net_forward.3} parent=65 // loop_footer_branch
                  %708 = sbr.rel target = $region75
                $region80: #{mlp_net_forward.3} parent=65 // loop_exit
                  _
              $region66: #{mlp_net_forward.3} parent=43 // pred_fallthru
                _
              // Predicated region
              $region81: #{mlp_net_forward.3} parent=43 // pred_check
                _
              $region82: #{mlp_net_forward.3} parent=43 // pred_check_branch
                %727 = sbr.rel target = $region84
              $region83: #{mlp_net_forward.3} parent=43 // pred_region
                _
              $region84: #{mlp_net_forward.3} parent=43 // pred_fallthru
                _
            $region44: #{mlp_net_forward.3} parent=39 // pred_fallthru
              _
            // Predicated region
            $region45: #{mlp_net_forward.3} parent=39 // pred_check
              _
            $region46: #{mlp_net_forward.3} parent=39 // pred_check_branch
              %509 = sbr.rel target = $region48
            $region47: #{mlp_net_forward.3} parent=39 // pred_region
              %s511 = ssub.s32 256, 1
              %s512 = sshrl.u32 %s498, 5
              // While loop
              $region49: #{mlp_net_forward.3} parent=47 // loop_pre_header
                _
              $region50: #{mlp_net_forward.3} parent=47 // loop_header
                %s514 = sphi 0, %s516
                %p515 = scmp.ge.s32.totalorder %s514, %s512
                %s519 = sphi 0, %s588
                %s520 = sphi %s491, %s591
                %s521 = sphi %s502, %s592
              $region51: #{mlp_net_forward.3} parent=47 // loop_header_branch
                %518 = sbr.rel (%p515) target = $region55
              $region52: #{mlp_net_forward.3} parent=47 // loop_body
                %v522 = vld [vmem:[%s520] sm:%s511]
                %523 = vst [vmem:[%s521] sm:%s511] %v522
                %v524 = vld [vmem:[%s520 + $0x8] sm:%s511]
                %525 = vst [vmem:[%s521 + $0x8] sm:%s511] %v524
                %v526 = vld [vmem:[%s520 + $0x10] sm:%s511]
                %527 = vst [vmem:[%s521 + $0x10] sm:%s511] %v526
                %v528 = vld [vmem:[%s520 + $0x18] sm:%s511]
                %529 = vst [vmem:[%s521 + $0x18] sm:%s511] %v528
                %v530 = vld [vmem:[%s520 + $0x20] sm:%s511]
                %531 = vst [vmem:[%s521 + $0x20] sm:%s511] %v530
                %v532 = vld [vmem:[%s520 + $0x28] sm:%s511]
                %533 = vst [vmem:[%s521 + $0x28] sm:%s511] %v532
                %v534 = vld [vmem:[%s520 + $0x30] sm:%s511]
                %535 = vst [vmem:[%s521 + $0x30] sm:%s511] %v534
                %v536 = vld [vmem:[%s520 + $0x38] sm:%s511]
                %537 = vst [vmem:[%s521 + $0x38] sm:%s511] %v536
                %v538 = vld [vmem:[%s520 + $0x40] sm:%s511]
                %539 = vst [vmem:[%s521 + $0x40] sm:%s511] %v538
                %v540 = vld [vmem:[%s520 + $0x48] sm:%s511]
                %541 = vst [vmem:[%s521 + $0x48] sm:%s511] %v540
                %v542 = vld [vmem:[%s520 + $0x50] sm:%s511]
                %543 = vst [vmem:[%s521 + $0x50] sm:%s511] %v542
                %v544 = vld [vmem:[%s520 + $0x58] sm:%s511]
                %545 = vst [vmem:[%s521 + $0x58] sm:%s511] %v544
                %v546 = vld [vmem:[%s520 + $0x60] sm:%s511]
                %547 = vst [vmem:[%s521 + $0x60] sm:%s511] %v546
                %v548 = vld [vmem:[%s520 + $0x68] sm:%s511]
                %549 = vst [vmem:[%s521 + $0x68] sm:%s511] %v548
                %v550 = vld [vmem:[%s520 + $0x70] sm:%s511]
                %551 = vst [vmem:[%s521 + $0x70] sm:%s511] %v550
                %v552 = vld [vmem:[%s520 + $0x78] sm:%s511]
                %553 = vst [vmem:[%s521 + $0x78] sm:%s511] %v552
                %v554 = vld [vmem:[%s520 + $0x80] sm:%s511]
                %555 = vst [vmem:[%s521 + $0x80] sm:%s511] %v554
                %v556 = vld [vmem:[%s520 + $0x88] sm:%s511]
                %557 = vst [vmem:[%s521 + $0x88] sm:%s511] %v556
                %v558 = vld [vmem:[%s520 + $0x90] sm:%s511]
                %559 = vst [vmem:[%s521 + $0x90] sm:%s511] %v558
                %v560 = vld [vmem:[%s520 + $0x98] sm:%s511]
                %561 = vst [vmem:[%s521 + $0x98] sm:%s511] %v560
                %v562 = vld [vmem:[%s520 + $0xa0] sm:%s511]
                %563 = vst [vmem:[%s521 + $0xa0] sm:%s511] %v562
                %v564 = vld [vmem:[%s520 + $0xa8] sm:%s511]
                %565 = vst [vmem:[%s521 + $0xa8] sm:%s511] %v564
                %v566 = vld [vmem:[%s520 + $0xb0] sm:%s511]
                %567 = vst [vmem:[%s521 + $0xb0] sm:%s511] %v566
                %v568 = vld [vmem:[%s520 + $0xb8] sm:%s511]
                %569 = vst [vmem:[%s521 + $0xb8] sm:%s511] %v568
                %v570 = vld [vmem:[%s520 + $0xc0] sm:%s511]
                %571 = vst [vmem:[%s521 + $0xc0] sm:%s511] %v570
                %v572 = vld [vmem:[%s520 + $0xc8] sm:%s511]
                %573 = vst [vmem:[%s521 + $0xc8] sm:%s511] %v572
                %v574 = vld [vmem:[%s520 + $0xd0] sm:%s511]
                %575 = vst [vmem:[%s521 + $0xd0] sm:%s511] %v574
                %v576 = vld [vmem:[%s520 + $0xd8] sm:%s511]
                %577 = vst [vmem:[%s521 + $0xd8] sm:%s511] %v576
                %v578 = vld [vmem:[%s520 + $0xe0] sm:%s511]
                %579 = vst [vmem:[%s521 + $0xe0] sm:%s511] %v578
                %v580 = vld [vmem:[%s520 + $0xe8] sm:%s511]
                %581 = vst [vmem:[%s521 + $0xe8] sm:%s511] %v580
                %v582 = vld [vmem:[%s520 + $0xf0] sm:%s511]
                %583 = vst [vmem:[%s521 + $0xf0] sm:%s511] %v582
                %v584 = vld [vmem:[%s520 + $0xf8] sm:%s511]
                %585 = vst [vmem:[%s521 + $0xf8] sm:%s511] %v584
                %s586 = sadd.s32 1, %s519
                %p587 = scmp.ge.s32.totalorder %s586, %s512
                %s588 = scalar_select %p587, 0, %s586
                %s589 = smul.u32 %s588, 256
                %s590 = smul.u32 %s588, 256
                %s591 = scalar_lea.vmem %s491, %s589 [#allocation2]
                %s592 = scalar_lea.vmem %s502, %s590
              $region53: #{mlp_net_forward.3} parent=47 // loop_footer
                %s516 = sadd.s32 %s514, 1
              $region54: #{mlp_net_forward.3} parent=47 // loop_footer_branch
                %513 = sbr.rel target = $region50
              $region55: #{mlp_net_forward.3} parent=47 // loop_exit
                _
              %s593 = sshrl.u32 %s498, 5
              %s594 = sand.u32 %s498, 31
              %s595 = smul.u32 %s593, 32
              %s596 = smul.u32 8, %s595
              %s597 = scalar_lea.vmem %s491, %s596 [#allocation2]
              %s598 = smul.u32 8, %s595
              %s599 = scalar_lea.vmem %s502, %s598
              // While loop
              $region56: #{mlp_net_forward.3} parent=47 // loop_pre_header
                _
              $region57: #{mlp_net_forward.3} parent=47 // loop_header
                %s601 = sphi 0, %s603
                %p602 = scmp.ge.s32.totalorder %s601, %s594
                %s606 = sphi 0, %s613
                %s607 = sphi %s597, %s616
                %s608 = sphi %s599, %s617
              $region58: #{mlp_net_forward.3} parent=47 // loop_header_branch
                %605 = sbr.rel (%p602) target = $region62
              $region59: #{mlp_net_forward.3} parent=47 // loop_body
                %v609 = vld [vmem:[%s607] sm:%s511]
                %610 = vst [vmem:[%s608] sm:%s511] %v609
                %s611 = sadd.s32 1, %s606
                %p612 = scmp.ge.s32.totalorder %s611, %s594
                %s613 = scalar_select %p612, 0, %s611
                %s614 = smul.u32 %s613, 8
                %s615 = smul.u32 %s613, 8
                %s616 = scalar_lea.vmem %s597, %s614 [#allocation2]
                %s617 = scalar_lea.vmem %s599, %s615
              $region60: #{mlp_net_forward.3} parent=47 // loop_footer
                %s603 = sadd.s32 %s601, 1
              $region61: #{mlp_net_forward.3} parent=47 // loop_footer_branch
                %600 = sbr.rel target = $region57
              $region62: #{mlp_net_forward.3} parent=47 // loop_exit
                _
            $region48: #{mlp_net_forward.3} parent=39 // pred_fallthru
              _
          $region40: #{mlp_net_forward.3} parent=35 // pred_fallthru
            _
          %728 = vnop
        $region36: #{mlp_net_forward.3} parent=31 // pred_fallthru
          _
      $region32: #{mlp_net_forward.3} parent=5 // pred_fallthru
        _
      %p729 = scmp.le.s32.totalorder 2, %s9
      // Predicated region
      $region85: #{mlp_net_forward.3} parent=5 // pred_check
        %p730 = pneg %p729
      $region86: #{mlp_net_forward.3} parent=5 // pred_check_branch
        %732 = sbr.rel (%p730) target = $region88
      $region87: #{mlp_net_forward.3} parent=5 // pred_region
        %s733 = ssub.s32 %s9, 2
        // Predicated region
        $region89: #{mlp_net_forward.3} parent=87 // pred_check
          %p734 = pneg %p106
        $region90: #{mlp_net_forward.3} parent=87 // pred_check_branch
          %736 = sbr.rel (%p734) target = $region92
        $region91: #{mlp_net_forward.3} parent=87 // pred_region
          %s737 = sand.u32 %s91, 1
          %s738 = sand.u32 %s91, 1
          %s739 = smul.addr %s738, 256
          %s740 = scalar_lea.vmem [#allocation2], %s739
        $region92: #{mlp_net_forward.3} parent=87 // pred_fallthru
          _
      $region88: #{mlp_net_forward.3} parent=5 // pred_fallthru
        _
    $region6: #{mlp_net_forward.3} parent=1 // loop_footer
      %s13 = sadd.s32 1, %s9
    $region7: #{mlp_net_forward.3} parent=1 // loop_footer_branch
      %8 = sbr.rel target = $region3
    $region8: #{mlp_net_forward.3} parent=1 // loop_exit
      _

// kernel: mlp_net_forward.2
$region0: #{mlp_net_forward.2}
  #allocation0 [shape = 'u32[]', space=smem, size = 0x4, offset = 0x4, fixed_abs, tag = 'smem constant byte address 0x4 - core index']
  #allocation1 [shape = 'u32[72,128]{1,0:T(1,128)}', space=vmem, size = 0x9000, scoped, tag = 'internal scratch']
  %s0 = inlined_call_operand.vmem [shape: f32[1000,32], index: 0, kind: input, shape index: {}]
  %s1 = inlined_call_operand.vmem [shape: bf16[32,16], index: 1, kind: input, shape index: {}]
  %s2 = inlined_call_operand.vmem [shape: bf16[16,16], index: 2, kind: input, shape index: {}]
  %s3 = inlined_call_operand.vmem [shape: f32[2,16], index: 3, kind: input, shape index: {}]
  %s4 = inlined_call_operand.vmem [shape: bf16[1000,16], index: 4, kind: output, shape index: {0}]
  %s5 = inlined_call_operand.vmem [shape: f32[2,16], index: 5, kind: output, shape index: {1}]
  %6 = xla_tuple %s4, %s5
  %s7 = sld [smem:[#allocation0]]
  $region105: #{mlp_net_forward.2} parent=0
    _
  %s9 = ssub.s32 1, %s7
  %s10 = scalar_select 0, %s9, %s7
  $region1: #{mlp_net_forward.2} parent=0
    #allocation2 [shape = 'u8[131072]{0}', space=vmem, size = 0x20000, scoped, tag = 'output window, operand 0']
    loop: start=0, step=1, limit=6
    $region2: #{mlp_net_forward.2} parent=1 // loop_pre_header
      _
    $region3: #{mlp_net_forward.2} parent=1 // loop_header
      %s12 = sphi 0, %s16
      %p13 = scmp.ge.s32.totalorder %s12, 6
      %s22 = sphi 0, %s24
      %s25 = sphi 0, %s22
      %s26 = sphi 0, %s25
      %s42 = sphi 0, %s26
      %s46 = sphi 0, %s46
      %s48 = sphi 0, %s46
      %s49 = sphi 0, %s48
      %s63 = sphi 0, %s49
      %s67 = sphi 0, %s67
      %s69 = sphi 0, %s67
      %s70 = sphi 0, %s69
      %s84 = sphi 0, %s70
      %s88 = sphi 0, %s88
      %s90 = sphi 0, %s88
      %s91 = sphi 0, %s90
      %s105 = sphi 0, %s91
      %s111 = sphi 0, %s113
      %s114 = sphi 0, %s111
      %s115 = sphi 0, %s114
      %s131 = sphi 0, %s115
      %s135 = sphi 0, %s135
      %s137 = sphi 0, %s135
      %s138 = sphi 0, %s137
      %s152 = sphi 0, %s138
    $region4: #{mlp_net_forward.2} parent=1 // loop_header_branch
      %15 = sbr.rel (%p13) target = $region8
    $region5: #{mlp_net_forward.2} parent=1 // loop_body
      %s17 = ssub.s32 %s12, 1
      %s18 = ssub.s32 %s12, 2
      %s19 = sadd.s32 %s12, 1
      %s20 = ssub.s32 %s12, %s19
      %p21 = scmp.eq.s32.totalorder %s20, 0
      %s23 = sadd.s32 %s22, 1
      %s24 = scalar_select %p21, %s22, %s23
      %p27 = pneg %p21
      %p28 = scmp.eq.s32.totalorder %s12, 3
      %p29 = por %p27, %p28
      %p30 = scmp.ne.s32.totalorder %s22, %s25
      %p31 = scmp.eq.s32.totalorder %s12, 0
      %p32 = por %p30, %p31
      %p33 = scmp.ne.s32.totalorder %s22, %s25
      %p34 = scmp.eq.s32.totalorder %s17, 3
      %p35 = por %p33, %p34
      %p36 = scmp.ne.s32.totalorder %s25, %s26
      %p37 = scmp.eq.s32.totalorder %s17, 0
      %p38 = por %p36, %p37
      %p39 = scmp.ne.s32.totalorder %s25, %s26
      %p40 = scmp.eq.s32.totalorder %s18, 3
      %p41 = por %p39, %p40
      %p43 = scmp.ne.s32.totalorder %s26, %s42
      %p44 = scmp.eq.s32.totalorder %s18, 0
      %p45 = por %p43, %p44
      %s47 = sadd.s32 %s46, 1
      %p50 = scmp.eq.s32.totalorder %s12, 3
      %p51 = scmp.ne.s32.totalorder %s46, %s48
      %p52 = scmp.eq.s32.totalorder %s12, 0
      %p53 = por %p51, %p52
      %p54 = scmp.ne.s32.totalorder %s46, %s48
      %p55 = scmp.eq.s32.totalorder %s17, 3
      %p56 = por %p54, %p55
      %p57 = scmp.ne.s32.totalorder %s48, %s49
      %p58 = scmp.eq.s32.totalorder %s17, 0
      %p59 = por %p57, %p58
      %p60 = scmp.ne.s32.totalorder %s48, %s49
      %p61 = scmp.eq.s32.totalorder %s18, 3
      %p62 = por %p60, %p61
      %p64 = scmp.ne.s32.totalorder %s49, %s63
      %p65 = scmp.eq.s32.totalorder %s18, 0
      %p66 = por %p64, %p65
      %s68 = sadd.s32 %s67, 1
      %p71 = scmp.eq.s32.totalorder %s12, 3
      %p72 = scmp.ne.s32.totalorder %s67, %s69
      %p73 = scmp.eq.s32.totalorder %s12, 0
      %p74 = por %p72, %p73
      %p75 = scmp.ne.s32.totalorder %s67, %s69
      %p76 = scmp.eq.s32.totalorder %s17, 3
      %p77 = por %p75, %p76
      %p78 = scmp.ne.s32.totalorder %s69, %s70
      %p79 = scmp.eq.s32.totalorder %s17, 0
      %p80 = por %p78, %p79
      %p81 = scmp.ne.s32.totalorder %s69, %s70
      %p82 = scmp.eq.s32.totalorder %s18, 3
      %p83 = por %p81, %p82
      %p85 = scmp.ne.s32.totalorder %s70, %s84
      %p86 = scmp.eq.s32.totalorder %s18, 0
      %p87 = por %p85, %p86
      %s89 = sadd.s32 %s88, 1
      %p92 = scmp.eq.s32.totalorder %s12, 3
      %p93 = scmp.ne.s32.totalorder %s88, %s90
      %p94 = scmp.eq.s32.totalorder %s12, 0
      %p95 = por %p93, %p94
      %p96 = scmp.ne.s32.totalorder %s88, %s90
      %p97 = scmp.eq.s32.totalorder %s17, 3
      %p98 = por %p96, %p97
      %p99 = scmp.ne.s32.totalorder %s90, %s91
      %p100 = scmp.eq.s32.totalorder %s17, 0
      %p101 = por %p99, %p100
      %p102 = scmp.ne.s32.totalorder %s90, %s91
      %p103 = scmp.eq.s32.totalorder %s18, 3
      %p104 = por %p102, %p103
      %p106 = scmp.ne.s32.totalorder %s91, %s105
      %p107 = scmp.eq.s32.totalorder %s18, 0
      %p108 = por %p106, %p107
      %s109 = ssub.s32 %s12, %s19
      %p110 = scmp.eq.s32.totalorder %s109, 0
      %s112 = sadd.s32 %s111, 1
      %s113 = scalar_select %p110, %s111, %s112
      %p116 = pneg %p110
      %p117 = scmp.eq.s32.totalorder %s12, 3
      %p118 = por %p116, %p117
      %p119 = scmp.ne.s32.totalorder %s111, %s114
      %p120 = scmp.eq.s32.totalorder %s12, 0
      %p121 = por %p119, %p120
      %p122 = scmp.ne.s32.totalorder %s111, %s114
      %p123 = scmp.eq.s32.totalorder %s17, 3
      %p124 = por %p122, %p123
      %p125 = scmp.ne.s32.totalorder %s114, %s115
      %p126 = scmp.eq.s32.totalorder %s17, 0
      %p127 = por %p125, %p126
      %p128 = scmp.ne.s32.totalorder %s114, %s115
      %p129 = scmp.eq.s32.totalorder %s18, 3
      %p130 = por %p128, %p129
      %p132 = scmp.ne.s32.totalorder %s115, %s131
      %p133 = scmp.eq.s32.totalorder %s18, 0
      %p134 = por %p132, %p133
      %s136 = sadd.s32 %s135, 1
      %p139 = scmp.eq.s32.totalorder %s12, 3
      %p140 = scmp.ne.s32.totalorder %s135, %s137
      %p141 = scmp.eq.s32.totalorder %s12, 0
      %p142 = por %p140, %p141
      %p143 = scmp.ne.s32.totalorder %s135, %s137
      %p144 = scmp.eq.s32.totalorder %s17, 3
      %p145 = por %p143, %p144
      %p146 = scmp.ne.s32.totalorder %s137, %s138
      %p147 = scmp.eq.s32.totalorder %s17, 0
      %p148 = por %p146, %p147
      %p149 = scmp.ne.s32.totalorder %s137, %s138
      %p150 = scmp.eq.s32.totalorder %s18, 3
      %p151 = por %p149, %p150
      %p153 = scmp.ne.s32.totalorder %s138, %s152
      %p154 = scmp.eq.s32.totalorder %s18, 0
      %p155 = por %p153, %p154
      %p156 = scmp.le.s32.totalorder 1, %s12
      %p157 = scmp.lt.s32.totalorder %s12, 5
      %p158 = pnand %p156, %p157
      %p159 = pneg %p158
      // Predicated region
      $region9: #{mlp_net_forward.2} parent=5 // pred_check
        _
      $region10: #{mlp_net_forward.2} parent=5 // pred_check_branch
        %161 = sbr.rel (%p158) target = $region12
      $region11: #{mlp_net_forward.2} parent=5 // pred_region
        %s162 = ssub.s32 %s12, 1
        // Predicated region
        $region13: #{mlp_net_forward.2} parent=11 // pred_check
          %p163 = pneg %p59
        $region14: #{mlp_net_forward.2} parent=11 // pred_check_branch
          %165 = sbr.rel (%p163) target = $region16
        $region15: #{mlp_net_forward.2} parent=11 // pred_region
          _
        $region16: #{mlp_net_forward.2} parent=11 // pred_fallthru
          _
        // Predicated region
        $region17: #{mlp_net_forward.2} parent=11 // pred_check
          %p166 = pneg %p80
        $region18: #{mlp_net_forward.2} parent=11 // pred_check_branch
          %168 = sbr.rel (%p166) target = $region20
        $region19: #{mlp_net_forward.2} parent=11 // pred_region
          _
        $region20: #{mlp_net_forward.2} parent=11 // pred_fallthru
          _
        // Predicated region
        $region21: #{mlp_net_forward.2} parent=11 // pred_check
          %p169 = pneg %p101
        $region22: #{mlp_net_forward.2} parent=11 // pred_check_branch
          %171 = sbr.rel (%p169) target = $region24
        $region23: #{mlp_net_forward.2} parent=11 // pred_region
          _
        $region24: #{mlp_net_forward.2} parent=11 // pred_fallthru
          _
      $region12: #{mlp_net_forward.2} parent=5 // pred_fallthru
        _
      %p172 = scmp.lt.s32.totalorder %s12, 4
      // Predicated region
      $region25: #{mlp_net_forward.2} parent=5 // pred_check
        %p173 = pneg %p172
      $region26: #{mlp_net_forward.2} parent=5 // pred_check_branch
        %175 = sbr.rel (%p173) target = $region28
      $region27: #{mlp_net_forward.2} parent=5 // pred_region
        // Predicated region
        $region29: #{mlp_net_forward.2} parent=27 // pred_check
          %p176 = pneg %p32
        $region30: #{mlp_net_forward.2} parent=27 // pred_check_branch
          %178 = sbr.rel (%p176) target = $region32
        $region31: #{mlp_net_forward.2} parent=27 // pred_region
          %s179 = smul.u32 32, %s12
          %s180 = ssub.s32 125, %s179
          %p181 = scmp.lt.s32.totalorder %s180, 32
          %s182 = scalar_select %p181, %s180, 32
          %s183 = smul.u32 8, %s182
          %p184 = scmp.lt.s32.totalorder %s179, 124
          %s185 = scalar_select %p184, %s179, 124
          %s186 = smul.addr %s185, 8
          %s187 = scalar_lea.vmem %s0, %s186
          %s188 = smul.u32 32, %s12
          %s189 = ssub.s32 125, %s188
          %p190 = scmp.lt.s32.totalorder %s189, 32
          %s191 = scalar_select %p190, %s189, 32
          %s192 = smul.u32 8, %s191
        $region32: #{mlp_net_forward.2} parent=27 // pred_fallthru
          _
      $region28: #{mlp_net_forward.2} parent=5 // pred_fallthru
        _
      %p193 = scmp.le.s32.totalorder 1, %s12
      %p194 = scmp.lt.s32.totalorder %s12, 5
      %p195 = pnand %p193, %p194
      %p196 = pneg %p195
      // Predicated region
      $region33: #{mlp_net_forward.2} parent=5 // pred_check
        _
      $region34: #{mlp_net_forward.2} parent=5 // pred_check_branch
        %198 = sbr.rel (%p195) target = $region36
      $region35: #{mlp_net_forward.2} parent=5 // pred_region
        %s199 = ssub.s32 %s12, 1
        %s200 = smul.u32 32, %s17
        %s201 = ssub.s32 125, %s200
        %p202 = scmp.lt.s32.totalorder %s201, 32
        %s203 = scalar_select %p202, %s201, 32
        %s204 = smul.u32 8, %s203
        %p205 = scmp.lt.s32.totalorder %s200, 124
        %s206 = scalar_select %p205, %s200, 124
        %s207 = smul.addr %s206, 8
        %s208 = scalar_lea.vmem %s0, %s207
        %p209 = pneg %p38
        %p210 = pneg %p35
        %p211 = pneg %p59
        %p212 = pneg %p56
        %p213 = pneg %p80
        %p214 = pneg %p77
        %p215 = pneg %p101
        %p216 = pneg %p98
        %p217 = pneg %p127
        %p218 = pneg %p124
        %s219 = sand.u32 %s114, 1
        %s220 = sand.u32 %s114, 1
        %s221 = smul.addr %s220, 128
        %s222 = scalar_lea.vmem [#allocation2], %s221
        %p223 = pneg %p148
        %p224 = pneg %p145
        %s225 = smul.u32 32, %s17
        %s226 = ssub.s32 125, %s225
        %p227 = scmp.lt.s32.totalorder %s226, 32
        %s228 = scalar_select %p227, %s226, 32
        %s229 = smul.u32 8, %s228
        %p230 = scmp.lt.s32.totalorder %s225, 124
        %s231 = scalar_select %p230, %s225, 124
        %s232 = smul.addr %s231, 8
        %s233 = scalar_lea.vmem %s0, %s232
        %s234 = smul.u32 32, %s17
        %s235 = ssub.s32 125, %s234
        %p236 = scmp.lt.s32.totalorder %s235, 32
        %s237 = scalar_select %p236, %s235, 32
        %s238 = smul.u32 8, %s237
        %s239 = smul.u32 32, %s17
        %s240 = ssub.s32 125, %s239
        %p241 = scmp.lt.s32.totalorder %s240, 32
        %s242 = scalar_select %p241, %s240, 32
        %s243 = smul.u32 4, %s242
        %p245 = scmp.eq.s32.totalorder %s17, 0
        // Predicated region
        $region37: #{mlp_net_forward.2} parent=35 // pred_check
          %p246 = pneg %p245
        $region38: #{mlp_net_forward.2} parent=35 // pred_check_branch
          %248 = sbr.rel (%p246) target = $region40
        $region39: #{mlp_net_forward.2} parent=35 // pred_region
          %vm249 = vcmask 123904
          %250 = vst.msk [vmem:[%s5] sm:$0x3] %vm249, 0.0
        $region40: #{mlp_net_forward.2} parent=35 // pred_fallthru
          _
        %v251 = vld [vmem:[%s3] sm:$0x1]
        %v252 = vld [vmem:[%s3 + $0x1] sm:$0x1]
        %v253 = vld [vmem:[%s233] sm:$0xff]
        %v254 = vld [vmem:[%s233 + $0x8] sm:$0xff]
        %v255 = vld [vmem:[%s233 + $0x10] sm:$0xff]
        %v256 = vld [vmem:[%s233 + $0x18] sm:$0xff]
        %v257 = vld [vmem:[%s233 + $0x20] sm:$0xff]
        %v258 = vld [vmem:[%s233 + $0x28] sm:$0xff]
        %v259 = vld [vmem:[%s233 + $0x30] sm:$0xff]
        %v260 = vld [vmem:[%s233 + $0x38] sm:$0xff]
        %v261 = vld [vmem:[%s233 + $0x40] sm:$0xff]
        %v262 = vld [vmem:[%s233 + $0x48] sm:$0xff]
        %v263 = vld [vmem:[%s233 + $0x50] sm:$0xff]
        %v264 = vld [vmem:[%s233 + $0x58] sm:$0xff]
        %v265 = vld [vmem:[%s233 + $0x60] sm:$0xff]
        %v266 = vld [vmem:[%s233 + $0x68] sm:$0xff]
        %v267 = vld [vmem:[%s233 + $0x70] sm:$0xff]
        %v268 = vld [vmem:[%s233 + $0x78] sm:$0xff]
        %v269 = vld [vmem:[%s233 + $0x80] sm:$0xff]
        %v270 = vld [vmem:[%s233 + $0x88] sm:$0xff]
        %v271 = vld [vmem:[%s233 + $0x90] sm:$0xff]
        %v272 = vld [vmem:[%s233 + $0x98] sm:$0xff]
        %v273 = vld [vmem:[%s233 + $0xa0] sm:$0xff]
        %v274 = vld [vmem:[%s233 + $0xa8] sm:$0xff]
        %v275 = vld [vmem:[%s233 + $0xb0] sm:$0xff]
        %v276 = vld [vmem:[%s233 + $0xb8] sm:$0xff]
        %v277 = vld [vmem:[%s233 + $0xc0] sm:$0xff]
        %v278 = vld [vmem:[%s233 + $0xc8] sm:$0xff]
        %v279 = vld [vmem:[%s233 + $0xd0] sm:$0xff]
        %v280 = vld [vmem:[%s233 + $0xd8] sm:$0xff]
        %v281 = vld [vmem:[%s233 + $0xe0] sm:$0xff]
        %v282 = vld [vmem:[%s233 + $0xe8] sm:$0xff]
        %v283 = vld [vmem:[%s233 + $0xf0] sm:$0xff]
        %v284 = vld [vmem:[%s233 + $0xf8] sm:$0xff]
        %v285 = vpack.c.bf16 %v254, %v253
        %v286 = vpack.c.bf16 %v256, %v255
        %v287 = vpack.c.bf16 %v258, %v257
        %v288 = vpack.c.bf16 %v260, %v259
        %v289 = vpack.c.bf16 %v262, %v261
        %v290 = vpack.c.bf16 %v264, %v263
        %v291 = vpack.c.bf16 %v266, %v265
        %v292 = vpack.c.bf16 %v268, %v267
        %v293 = vpack.c.bf16 %v270, %v269
        %v294 = vpack.c.bf16 %v272, %v271
        %v295 = vpack.c.bf16 %v274, %v273
        %v296 = vpack.c.bf16 %v276, %v275
        %v297 = vpack.c.bf16 %v278, %v277
        %v298 = vpack.c.bf16 %v280, %v279
        %v299 = vpack.c.bf16 %v282, %v281
        %v300 = vpack.c.bf16 %v284, %v283
        %v301 = vld [vmem:[%s1] sm:$0xf]
        %v302 = vld [vmem:[%s1 + $0x4] sm:$0xf]
        %v303 = vld [vmem:[%s1 + $0x8] sm:$0xf]
        %v304 = vld [vmem:[%s1 + $0xc] sm:$0xf]
        %v305 = vperm.slane %v251, 0
        %v310 = vunpack.c.l.b16 %v301
        %v311 = vunpack.c.l.b16 %v302
        %v312 = vunpack.c.l.b16 %v303
        %v313 = vunpack.c.l.b16 %v304
        %v314 = vpack.c.b16 %v311, %v310
        %v315 = vpack.c.b16 %v313, %v312
        %vm318 = vcmask 261120
        %v320 = vsel %vm318, %v285, 0
        %v323 = vsel %vm318, %v286, 0
        %v326 = vsel %vm318, %v287, 0
        %v329 = vsel %vm318, %v288, 0
        %v332 = vsel %vm318, %v289, 0
        %v335 = vsel %vm318, %v290, 0
        %v338 = vsel %vm318, %v291, 0
        %v341 = vsel %vm318, %v292, 0
        %v344 = vsel %vm318, %v293, 0
        %v347 = vsel %vm318, %v294, 0
        %v350 = vsel %vm318, %v295, 0
        %v353 = vsel %vm318, %v296, 0
        %v356 = vsel %vm318, %v297, 0
        %v359 = vsel %vm318, %v298, 0
        %v362 = vsel %vm318, %v299, 0
        %v365 = vsel %vm318, %v300, 0
        %367 = vmatpush.bf16.msra.mxu0 0
        %368 = vmatpush.bf16.msra.mxu0 0
        %369 = vmatpush.bf16.msra.mxu0 0
        %370 = vmatpush.bf16.msra.mxu0 0
        %371 = vmatpush.bf16.msra.mxu0 0
        %372 = vmatpush.bf16.msra.mxu0 0
        %373 = vmatpush.bf16.msra.mxu0 %v315
        %374 = vmatpush.bf16.msra.mxu0 %v314
        %375 = vmatmul.bf16.gmra.mxu0 %v320
        %v376 = vpop.f32.mrf.mxu0
        %v377 = vadd.f32 %v305, %v376
        %v378 = vpop.f32.mrf.mxu0
        %v379 = vadd.f32 %v305, %v378
        %380 = vmatmul.bf16.gmra.mxu0 %v323
        %v381 = vpop.f32.mrf.mxu0
        %v382 = vadd.f32 %v305, %v381
        %v383 = vpop.f32.mrf.mxu0
        %v384 = vadd.f32 %v305, %v383
        %385 = vmatmul.bf16.gmra.mxu0 %v326
        %v386 = vpop.f32.mrf.mxu0
        %v387 = vadd.f32 %v305, %v386
        %v388 = vpop.f32.mrf.mxu0
        %v389 = vadd.f32 %v305, %v388
        %390 = vmatmul.bf16.gmra.mxu0 %v329
        %v391 = vpop.f32.mrf.mxu0
        %v392 = vadd.f32 %v305, %v391
        %v393 = vpop.f32.mrf.mxu0
        %v394 = vadd.f32 %v305, %v393
        %395 = vmatmul.bf16.gmra.mxu0 %v332
        %v396 = vpop.f32.mrf.mxu0
        %v397 = vadd.f32 %v305, %v396
        %v398 = vpop.f32.mrf.mxu0
        %v399 = vadd.f32 %v305, %v398
        %400 = vmatmul.bf16.gmra.mxu0 %v335
        %v401 = vpop.f32.mrf.mxu0
        %v402 = vadd.f32 %v305, %v401
        %v403 = vpop.f32.mrf.mxu0
        %v404 = vadd.f32 %v305, %v403
        %405 = vmatmul.bf16.gmra.mxu0 %v338
        %v406 = vpop.f32.mrf.mxu0
        %v407 = vadd.f32 %v305, %v406
        %v408 = vpop.f32.mrf.mxu0
        %v409 = vadd.f32 %v305, %v408
        %410 = vmatmul.bf16.gmra.mxu0 %v341
        %v411 = vpop.f32.mrf.mxu0
        %v412 = vadd.f32 %v305, %v411
        %v413 = vpop.f32.mrf.mxu0
        %v414 = vadd.f32 %v305, %v413
        %415 = vmatmul.bf16.gmra.mxu0 %v344
        %v416 = vpop.f32.mrf.mxu0
        %v417 = vadd.f32 %v305, %v416
        %v418 = vpop.f32.mrf.mxu0
        %v419 = vadd.f32 %v305, %v418
        %420 = vmatmul.bf16.gmra.mxu0 %v347
        %v421 = vpop.f32.mrf.mxu0
        %v422 = vadd.f32 %v305, %v421
        %v423 = vpop.f32.mrf.mxu0
        %v424 = vadd.f32 %v305, %v423
        %425 = vmatmul.bf16.gmra.mxu0 %v350
        %v426 = vpop.f32.mrf.mxu0
        %v427 = vadd.f32 %v305, %v426
        %v428 = vpop.f32.mrf.mxu0
        %v429 = vadd.f32 %v305, %v428
        %430 = vmatmul.bf16.gmra.mxu0 %v353
        %v431 = vpop.f32.mrf.mxu0
        %v432 = vadd.f32 %v305, %v431
        %v433 = vpop.f32.mrf.mxu0
        %v434 = vadd.f32 %v305, %v433
        %435 = vmatmul.bf16.gmra.mxu0 %v356
        %v436 = vpop.f32.mrf.mxu0
        %v437 = vadd.f32 %v305, %v436
        %v438 = vpop.f32.mrf.mxu0
        %v439 = vadd.f32 %v305, %v438
        %440 = vmatmul.bf16.gmra.mxu0 %v359
        %v441 = vpop.f32.mrf.mxu0
        %v442 = vadd.f32 %v305, %v441
        %v443 = vpop.f32.mrf.mxu0
        %v444 = vadd.f32 %v305, %v443
        %445 = vmatmul.bf16.gmra.mxu0 %v362
        %v446 = vpop.f32.mrf.mxu0
        %v447 = vadd.f32 %v305, %v446
        %v448 = vpop.f32.mrf.mxu0
        %v449 = vadd.f32 %v305, %v448
        %450 = vmatmul.bf16.gmra.mxu0 %v365
        %v451 = vpop.f32.mrf.mxu0
        %v452 = vadd.f32 %v305, %v451
        %v453 = vpop.f32.mrf.mxu0
        %v454 = vadd.f32 %v305, %v453
        %455 = vdwg.mxu0
        %v456 = vmax.f32 %v377, 0.0
        %v457 = vmax.f32 %v379, 0.0
        %v458 = vmax.f32 %v382, 0.0
        %v459 = vmax.f32 %v384, 0.0
        %v460 = vmax.f32 %v387, 0.0
        %v461 = vmax.f32 %v389, 0.0
        %v462 = vmax.f32 %v392, 0.0
        %v463 = vmax.f32 %v394, 0.0
        %v464 = vmax.f32 %v397, 0.0
        %v465 = vmax.f32 %v399, 0.0
        %v466 = vmax.f32 %v402, 0.0
        %v467 = vmax.f32 %v404, 0.0
        %v468 = vmax.f32 %v407, 0.0
        %v469 = vmax.f32 %v409, 0.0
        %v470 = vmax.f32 %v412, 0.0
        %v471 = vmax.f32 %v414, 0.0
        %v472 = vmax.f32 %v417, 0.0
        %v473 = vmax.f32 %v419, 0.0
        %v474 = vmax.f32 %v422, 0.0
        %v475 = vmax.f32 %v424, 0.0
        %v476 = vmax.f32 %v427, 0.0
        %v477 = vmax.f32 %v429, 0.0
        %v478 = vmax.f32 %v432, 0.0
        %v479 = vmax.f32 %v434, 0.0
        %v480 = vmax.f32 %v437, 0.0
        %v481 = vmax.f32 %v439, 0.0
        %v482 = vmax.f32 %v442, 0.0
        %v483 = vmax.f32 %v444, 0.0
        %v484 = vmax.f32 %v447, 0.0
        %v485 = vmax.f32 %v449, 0.0
        %v486 = vmax.f32 %v452, 0.0
        %v487 = vmax.f32 %v454, 0.0
        %v488 = vpack.c.bf16 %v457, %v456
        %v489 = vpack.c.bf16 %v459, %v458
        %v490 = vpack.c.bf16 %v461, %v460
        %v491 = vpack.c.bf16 %v463, %v462
        %v492 = vpack.c.bf16 %v465, %v464
        %v493 = vpack.c.bf16 %v467, %v466
        %v494 = vpack.c.bf16 %v469, %v468
        %v495 = vpack.c.bf16 %v471, %v470
        %v496 = vpack.c.bf16 %v473, %v472
        %v497 = vpack.c.bf16 %v475, %v474
        %v498 = vpack.c.bf16 %v477, %v476
        %v499 = vpack.c.bf16 %v479, %v478
        %v500 = vpack.c.bf16 %v481, %v480
        %v501 = vpack.c.bf16 %v483, %v482
        %v502 = vpack.c.bf16 %v485, %v484
        %v503 = vpack.c.bf16 %v487, %v486
        %v504 = vld [vmem:[%s2] sm:$0xf]
        %v505 = vld [vmem:[%s2 + $0x4] sm:$0xf]
        %v506 = vperm.slane %v252, 0
        %v509 = vunpack.c.l.b16 %v504
        %v510 = vunpack.c.l.b16 %v505
        %v511 = vpack.c.b16 %v510, %v509
        %vm513 = vcmask 130048
        %v515 = vsel %vm513, %v488, 0
        %v518 = vsel %vm513, %v489, 0
        %v521 = vsel %vm513, %v490, 0
        %v524 = vsel %vm513, %v491, 0
        %v527 = vsel %vm513, %v492, 0
        %v530 = vsel %vm513, %v493, 0
        %v533 = vsel %vm513, %v494, 0
        %v536 = vsel %vm513, %v495, 0
        %v539 = vsel %vm513, %v496, 0
        %v542 = vsel %vm513, %v497, 0
        %v545 = vsel %vm513, %v498, 0
        %v548 = vsel %vm513, %v499, 0
        %v551 = vsel %vm513, %v500, 0
        %v554 = vsel %vm513, %v501, 0
        %v557 = vsel %vm513, %v502, 0
        %v560 = vsel %vm513, %v503, 0
        %562 = vmatpush.bf16.msra.mxu0 0
        %563 = vmatpush.bf16.msra.mxu0 0
        %564 = vmatpush.bf16.msra.mxu0 0
        %565 = vmatpush.bf16.msra.mxu0 0
        %566 = vmatpush.bf16.msra.mxu0 0
        %567 = vmatpush.bf16.msra.mxu0 0
        %568 = vmatpush.bf16.msra.mxu0 0
        %569 = vmatpush.bf16.msra.mxu0 %v511
        %570 = vmatmul.bf16.gmra.mxu0 %v515
        %v571 = vpop.f32.mrf.mxu0
        %v572 = vadd.f32 %v506, %v571
        %v573 = vpop.f32.mrf.mxu0
        %v574 = vadd.f32 %v506, %v573
        %575 = vmatmul.bf16.gmra.mxu0 %v518
        %v576 = vpop.f32.mrf.mxu0
        %v577 = vadd.f32 %v506, %v576
        %v578 = vpop.f32.mrf.mxu0
        %v579 = vadd.f32 %v506, %v578
        %580 = vmatmul.bf16.gmra.mxu0 %v521
        %v581 = vpop.f32.mrf.mxu0
        %v582 = vadd.f32 %v506, %v581
        %v583 = vpop.f32.mrf.mxu0
        %v584 = vadd.f32 %v506, %v583
        %585 = vmatmul.bf16.gmra.mxu0 %v524
        %v586 = vpop.f32.mrf.mxu0
        %v587 = vadd.f32 %v506, %v586
        %v588 = vpop.f32.mrf.mxu0
        %v589 = vadd.f32 %v506, %v588
        %590 = vmatmul.bf16.gmra.mxu0 %v527
        %v591 = vpop.f32.mrf.mxu0
        %v592 = vadd.f32 %v506, %v591
        %v593 = vpop.f32.mrf.mxu0
        %v594 = vadd.f32 %v506, %v593
        %595 = vmatmul.bf16.gmra.mxu0 %v530
        %v596 = vpop.f32.mrf.mxu0
        %v597 = vadd.f32 %v506, %v596
        %v598 = vpop.f32.mrf.mxu0
        %v599 = vadd.f32 %v506, %v598
        %600 = vmatmul.bf16.gmra.mxu0 %v533
        %v601 = vpop.f32.mrf.mxu0
        %v602 = vadd.f32 %v506, %v601
        %v603 = vpop.f32.mrf.mxu0
        %v604 = vadd.f32 %v506, %v603
        %605 = vmatmul.bf16.gmra.mxu0 %v536
        %v606 = vpop.f32.mrf.mxu0
        %v607 = vadd.f32 %v506, %v606
        %v608 = vpop.f32.mrf.mxu0
        %v609 = vadd.f32 %v506, %v608
        %610 = vmatmul.bf16.gmra.mxu0 %v539
        %v611 = vpop.f32.mrf.mxu0
        %v612 = vadd.f32 %v506, %v611
        %v613 = vpop.f32.mrf.mxu0
        %v614 = vadd.f32 %v506, %v613
        %615 = vmatmul.bf16.gmra.mxu0 %v542
        %v616 = vpop.f32.mrf.mxu0
        %v617 = vadd.f32 %v506, %v616
        %v618 = vpop.f32.mrf.mxu0
        %v619 = vadd.f32 %v506, %v618
        %620 = vmatmul.bf16.gmra.mxu0 %v545
        %v621 = vpop.f32.mrf.mxu0
        %v622 = vadd.f32 %v506, %v621
        %v623 = vpop.f32.mrf.mxu0
        %v624 = vadd.f32 %v506, %v623
        %625 = vmatmul.bf16.gmra.mxu0 %v548
        %v626 = vpop.f32.mrf.mxu0
        %v627 = vadd.f32 %v506, %v626
        %v628 = vpop.f32.mrf.mxu0
        %v629 = vadd.f32 %v506, %v628
        %630 = vmatmul.bf16.gmra.mxu0 %v551
        %v631 = vpop.f32.mrf.mxu0
        %v632 = vadd.f32 %v506, %v631
        %v633 = vpop.f32.mrf.mxu0
        %v634 = vadd.f32 %v506, %v633
        %635 = vmatmul.bf16.gmra.mxu0 %v554
        %v636 = vpop.f32.mrf.mxu0
        %v637 = vadd.f32 %v506, %v636
        %v638 = vpop.f32.mrf.mxu0
        %v639 = vadd.f32 %v506, %v638
        %640 = vmatmul.bf16.gmra.mxu0 %v557
        %v641 = vpop.f32.mrf.mxu0
        %v642 = vadd.f32 %v506, %v641
        %v643 = vpop.f32.mrf.mxu0
        %v644 = vadd.f32 %v506, %v643
        %645 = vmatmul.bf16.gmra.mxu0 %v560
        %v646 = vpop.f32.mrf.mxu0
        %v647 = vadd.f32 %v506, %v646
        %v648 = vpop.f32.mrf.mxu0
        %v649 = vadd.f32 %v506, %v648
        %650 = vdwg.mxu0
        %v651 = vmax.f32 %v572, 0.0
        %v652 = vmax.f32 %v574, 0.0
        %v653 = vmax.f32 %v577, 0.0
        %v654 = vmax.f32 %v579, 0.0
        %v655 = vmax.f32 %v582, 0.0
        %v656 = vmax.f32 %v584, 0.0
        %v657 = vmax.f32 %v587, 0.0
        %v658 = vmax.f32 %v589, 0.0
        %v659 = vmax.f32 %v592, 0.0
        %v660 = vmax.f32 %v594, 0.0
        %v661 = vmax.f32 %v597, 0.0
        %v662 = vmax.f32 %v599, 0.0
        %v663 = vmax.f32 %v602, 0.0
        %v664 = vmax.f32 %v604, 0.0
        %v665 = vmax.f32 %v607, 0.0
        %v666 = vmax.f32 %v609, 0.0
        %v667 = vmax.f32 %v612, 0.0
        %v668 = vmax.f32 %v614, 0.0
        %v669 = vmax.f32 %v617, 0.0
        %v670 = vmax.f32 %v619, 0.0
        %v671 = vmax.f32 %v622, 0.0
        %v672 = vmax.f32 %v624, 0.0
        %v673 = vmax.f32 %v627, 0.0
        %v674 = vmax.f32 %v629, 0.0
        %v675 = vmax.f32 %v632, 0.0
        %v676 = vmax.f32 %v634, 0.0
        %v677 = vmax.f32 %v637, 0.0
        %v678 = vmax.f32 %v639, 0.0
        %v679 = vmax.f32 %v642, 0.0
        %v680 = vmax.f32 %v644, 0.0
        %v681 = vmax.f32 %v647, 0.0
        %v682 = vmax.f32 %v649, 0.0
        %v683 = vpack.c.bf16 %v651, %v651
        %v684 = vpack.c.bf16 %v652, %v652
        %v685 = vpack.c.bf16 %v653, %v653
        %v686 = vpack.c.bf16 %v654, %v654
        %v687 = vpack.c.bf16 %v655, %v655
        %v688 = vpack.c.bf16 %v656, %v656
        %v689 = vpack.c.bf16 %v657, %v657
        %v690 = vpack.c.bf16 %v658, %v658
        %v691 = vpack.c.bf16 %v659, %v659
        %v692 = vpack.c.bf16 %v660, %v660
        %v693 = vpack.c.bf16 %v661, %v661
        %v694 = vpack.c.bf16 %v662, %v662
        %v695 = vpack.c.bf16 %v663, %v663
        %v696 = vpack.c.bf16 %v664, %v664
        %v697 = vpack.c.bf16 %v665, %v665
        %v698 = vpack.c.bf16 %v666, %v666
        %v699 = vpack.c.bf16 %v667, %v667
        %v700 = vpack.c.bf16 %v668, %v668
        %v701 = vpack.c.bf16 %v669, %v669
        %v702 = vpack.c.bf16 %v670, %v670
        %v703 = vpack.c.bf16 %v671, %v671
        %v704 = vpack.c.bf16 %v672, %v672
        %v705 = vpack.c.bf16 %v673, %v673
        %v706 = vpack.c.bf16 %v674, %v674
        %v707 = vpack.c.bf16 %v675, %v675
        %v708 = vpack.c.bf16 %v676, %v676
        %v709 = vpack.c.bf16 %v677, %v677
        %v710 = vpack.c.bf16 %v678, %v678
        %v711 = vpack.c.bf16 %v679, %v679
        %v712 = vpack.c.bf16 %v680, %v680
        %v713 = vpack.c.bf16 %v681, %v681
        %v714 = vpack.c.bf16 %v682, %v682
        %vm715 = vcmask 125952
        %716 = vst.msk [vmem:[%s222] sm:$0xf] %vm715, %v683
        %717 = vst.msk [vmem:[%s222 + $0x4] sm:$0xf] %vm715, %v684
        %718 = vst.msk [vmem:[%s222 + $0x8] sm:$0xf] %vm715, %v685
        %719 = vst.msk [vmem:[%s222 + $0xc] sm:$0xf] %vm715, %v686
        %720 = vst.msk [vmem:[%s222 + $0x10] sm:$0xf] %vm715, %v687
        %721 = vst.msk [vmem:[%s222 + $0x14] sm:$0xf] %vm715, %v688
        %722 = vst.msk [vmem:[%s222 + $0x18] sm:$0xf] %vm715, %v689
        %723 = vst.msk [vmem:[%s222 + $0x1c] sm:$0xf] %vm715, %v690
        %724 = vst.msk [vmem:[%s222 + $0x20] sm:$0xf] %vm715, %v691
        %725 = vst.msk [vmem:[%s222 + $0x24] sm:$0xf] %vm715, %v692
        %726 = vst.msk [vmem:[%s222 + $0x28] sm:$0xf] %vm715, %v693
        %727 = vst.msk [vmem:[%s222 + $0x2c] sm:$0xf] %vm715, %v694
        %728 = vst.msk [vmem:[%s222 + $0x30] sm:$0xf] %vm715, %v695
        %729 = vst.msk [vmem:[%s222 + $0x34] sm:$0xf] %vm715, %v696
        %730 = vst.msk [vmem:[%s222 + $0x38] sm:$0xf] %vm715, %v697
        %731 = vst.msk [vmem:[%s222 + $0x3c] sm:$0xf] %vm715, %v698
        %732 = vst.msk [vmem:[%s222 + $0x40] sm:$0xf] %vm715, %v699
        %733 = vst.msk [vmem:[%s222 + $0x44] sm:$0xf] %vm715, %v700
        %734 = vst.msk [vmem:[%s222 + $0x48] sm:$0xf] %vm715, %v701
        %735 = vst.msk [vmem:[%s222 + $0x4c] sm:$0xf] %vm715, %v702
        %736 = vst.msk [vmem:[%s222 + $0x50] sm:$0xf] %vm715, %v703
        %737 = vst.msk [vmem:[%s222 + $0x54] sm:$0xf] %vm715, %v704
        %738 = vst.msk [vmem:[%s222 + $0x58] sm:$0xf] %vm715, %v705
        %739 = vst.msk [vmem:[%s222 + $0x5c] sm:$0xf] %vm715, %v706
        %740 = vst.msk [vmem:[%s222 + $0x60] sm:$0xf] %vm715, %v707
        %741 = vst.msk [vmem:[%s222 + $0x64] sm:$0xf] %vm715, %v708
        %742 = vst.msk [vmem:[%s222 + $0x68] sm:$0xf] %vm715, %v709
        %743 = vst.msk [vmem:[%s222 + $0x6c] sm:$0xf] %vm715, %v710
        %744 = vst.msk [vmem:[%s222 + $0x70] sm:$0xf] %vm715, %v711
        %745 = vst.msk [vmem:[%s222 + $0x74] sm:$0xf] %vm715, %v712
        %746 = vst.msk [vmem:[%s222 + $0x78] sm:$0xf] %vm715, %v713
        %747 = vst.msk [vmem:[%s222 + $0x7c] sm:$0xf] %vm715, %v714
        %s748 = smul.u32 %s17, 256
        %v749 = vlaneseq
        %v750 = vshrl.u32 %v749, 7
        %v751 = vadd.s32 %v750, 8
        %v752 = vadd.s32 %v750, 16
        %v753 = vadd.s32 %v750, 24
        %v754 = vadd.s32 %v750, 32
        %v755 = vadd.s32 %v750, 40
        %v756 = vadd.s32 %v750, 48
        %v757 = vadd.s32 %v750, 56
        %v758 = vadd.s32 %v750, 64
        %v759 = vadd.s32 %v750, 72
        %v760 = vadd.s32 %v750, 80
        %v761 = vadd.s32 %v750, 88
        %v762 = vadd.s32 %v750, 96
        %v763 = vadd.s32 %v750, 104
        %v764 = vadd.s32 %v750, 112
        %v765 = vadd.s32 %v750, 120
        %v766 = vadd.s32 %v750, 128
        %v767 = vadd.s32 %v750, 136
        %v768 = vadd.s32 %v750, 144
        %v769 = vadd.s32 %v750, 152
        %v770 = vadd.s32 %v750, 160
        %v771 = vadd.s32 %v750, 168
        %v772 = vadd.s32 %v750, 176
        %v773 = vadd.s32 %v750, 184
        %v774 = vadd.s32 %v750, 192
        %v775 = vadd.s32 %v750, 200
        %v776 = vadd.s32 %v750, 208
        %v777 = vadd.s32 %v750, 216
        %v778 = vadd.s32 %v750, 224
        %v779 = vadd.s32 %v750, 232
        %v780 = vadd.s32 %v750, 240
        %v781 = vadd.s32 %v750, 248
        %v782 = vstv %s748
        %v783 = vadd.s32 %v782, %v750
        %v784 = vadd.s32 %v782, %v751
        %v785 = vadd.s32 %v782, %v752
        %v786 = vadd.s32 %v782, %v753
        %v787 = vadd.s32 %v782, %v754
        %v788 = vadd.s32 %v782, %v755
        %v789 = vadd.s32 %v782, %v756
        %v790 = vadd.s32 %v782, %v757
        %v791 = vadd.s32 %v782, %v758
        %v792 = vadd.s32 %v782, %v759
        %v793 = vadd.s32 %v782, %v760
        %v794 = vadd.s32 %v782, %v761
        %v795 = vadd.s32 %v782, %v762
        %v796 = vadd.s32 %v782, %v763
        %v797 = vadd.s32 %v782, %v764
        %v798 = vadd.s32 %v782, %v765
        %v799 = vadd.s32 %v782, %v766
        %v800 = vadd.s32 %v782, %v767
        %v801 = vadd.s32 %v782, %v768
        %v802 = vadd.s32 %v782, %v769
        %v803 = vadd.s32 %v782, %v770
        %v804 = vadd.s32 %v782, %v771
        %v805 = vadd.s32 %v782, %v772
        %v806 = vadd.s32 %v782, %v773
        %v807 = vadd.s32 %v782, %v774
        %v808 = vadd.s32 %v782, %v775
        %v809 = vadd.s32 %v782, %v776
        %v810 = vadd.s32 %v782, %v777
        %v811 = vadd.s32 %v782, %v778
        %v812 = vadd.s32 %v782, %v779
        %v813 = vadd.s32 %v782, %v780
        %v814 = vadd.s32 %v782, %v781
        %vm815 = vcmp.lt.s32.totalorder %v783, 1000
        %vm816 = vcmp.lt.s32.totalorder %v784, 1000
        %vm817 = vcmp.lt.s32.totalorder %v785, 1000
        %vm818 = vcmp.lt.s32.totalorder %v786, 1000
        %vm819 = vcmp.lt.s32.totalorder %v787, 1000
        %vm820 = vcmp.lt.s32.totalorder %v788, 1000
        %vm821 = vcmp.lt.s32.totalorder %v789, 1000
        %vm822 = vcmp.lt.s32.totalorder %v790, 1000
        %vm823 = vcmp.lt.s32.totalorder %v791, 1000
        %vm824 = vcmp.lt.s32.totalorder %v792, 1000
        %vm825 = vcmp.lt.s32.totalorder %v793, 1000
        %vm826 = vcmp.lt.s32.totalorder %v794, 1000
        %vm827 = vcmp.lt.s32.totalorder %v795, 1000
        %vm828 = vcmp.lt.s32.totalorder %v796, 1000
        %vm829 = vcmp.lt.s32.totalorder %v797, 1000
        %vm830 = vcmp.lt.s32.totalorder %v798, 1000
        %vm831 = vcmp.lt.s32.totalorder %v799, 1000
        %vm832 = vcmp.lt.s32.totalorder %v800, 1000
        %vm833 = vcmp.lt.s32.totalorder %v801, 1000
        %vm834 = vcmp.lt.s32.totalorder %v802, 1000
        %vm835 = vcmp.lt.s32.totalorder %v803, 1000
        %vm836 = vcmp.lt.s32.totalorder %v804, 1000
        %vm837 = vcmp.lt.s32.totalorder %v805, 1000
        %vm838 = vcmp.lt.s32.totalorder %v806, 1000
        %vm839 = vcmp.lt.s32.totalorder %v807, 1000
        %vm840 = vcmp.lt.s32.totalorder %v808, 1000
        %vm841 = vcmp.lt.s32.totalorder %v809, 1000
        %vm842 = vcmp.lt.s32.totalorder %v810, 1000
        %vm843 = vcmp.lt.s32.totalorder %v811, 1000
        %vm844 = vcmp.lt.s32.totalorder %v812, 1000
        %vm845 = vcmp.lt.s32.totalorder %v813, 1000
        %vm846 = vcmp.lt.s32.totalorder %v814, 1000
        %v847 = vsel %vm815, 1, 0
        %v848 = vsel %vm816, 1, 0
        %v849 = vsel %vm817, 1, 0
        %v850 = vsel %vm818, 1, 0
        %v851 = vsel %vm819, 1, 0
        %v852 = vsel %vm820, 1, 0
        %v853 = vsel %vm821, 1, 0
        %v854 = vsel %vm822, 1, 0
        %v855 = vsel %vm823, 1, 0
        %v856 = vsel %vm824, 1, 0
        %v857 = vsel %vm825, 1, 0
        %v858 = vsel %vm826, 1, 0
        %v859 = vsel %vm827, 1, 0
        %v860 = vsel %vm828, 1, 0
        %v861 = vsel %vm829, 1, 0
        %v862 = vsel %vm830, 1, 0
        %v863 = vsel %vm831, 1, 0
        %v864 = vsel %vm832, 1, 0
        %v865 = vsel %vm833, 1, 0
        %v866 = vsel %vm834, 1, 0
        %v867 = vsel %vm835, 1, 0
        %v868 = vsel %vm836, 1, 0
        %v869 = vsel %vm837, 1, 0
        %v870 = vsel %vm838, 1, 0
        %v871 = vsel %vm839, 1, 0
        %v872 = vsel %vm840, 1, 0
        %v873 = vsel %vm841, 1, 0
        %v874 = vsel %vm842, 1, 0
        %v875 = vsel %vm843, 1, 0
        %v876 = vsel %vm844, 1, 0
        %v877 = vsel %vm845, 1, 0
        %v878 = vsel %vm846, 1, 0
        %vm879 = vcmp.eq.s32.totalorder %v847, 1
        %vm880 = vcmp.eq.s32.totalorder %v848, 1
        %vm881 = vcmp.eq.s32.totalorder %v849, 1
        %vm882 = vcmp.eq.s32.totalorder %v850, 1
        %vm883 = vcmp.eq.s32.totalorder %v851, 1
        %vm884 = vcmp.eq.s32.totalorder %v852, 1
        %vm885 = vcmp.eq.s32.totalorder %v853, 1
        %vm886 = vcmp.eq.s32.totalorder %v854, 1
        %vm887 = vcmp.eq.s32.totalorder %v855, 1
        %vm888 = vcmp.eq.s32.totalorder %v856, 1
        %vm889 = vcmp.eq.s32.totalorder %v857, 1
        %vm890 = vcmp.eq.s32.totalorder %v858, 1
        %vm891 = vcmp.eq.s32.totalorder %v859, 1
        %vm892 = vcmp.eq.s32.totalorder %v860, 1
        %vm893 = vcmp.eq.s32.totalorder %v861, 1
        %vm894 = vcmp.eq.s32.totalorder %v862, 1
        %vm895 = vcmp.eq.s32.totalorder %v863, 1
        %vm896 = vcmp.eq.s32.totalorder %v864, 1
        %vm897 = vcmp.eq.s32.totalorder %v865, 1
        %vm898 = vcmp.eq.s32.totalorder %v866, 1
        %vm899 = vcmp.eq.s32.totalorder %v867, 1
        %vm900 = vcmp.eq.s32.totalorder %v868, 1
        %vm901 = vcmp.eq.s32.totalorder %v869, 1
        %vm902 = vcmp.eq.s32.totalorder %v870, 1
        %vm903 = vcmp.eq.s32.totalorder %v871, 1
        %vm904 = vcmp.eq.s32.totalorder %v872, 1
        %vm905 = vcmp.eq.s32.totalorder %v873, 1
        %vm906 = vcmp.eq.s32.totalorder %v874, 1
        %vm907 = vcmp.eq.s32.totalorder %v875, 1
        %vm908 = vcmp.eq.s32.totalorder %v876, 1
        %vm909 = vcmp.eq.s32.totalorder %v877, 1
        %vm910 = vcmp.eq.s32.totalorder %v878, 1
        %v911 = vsel %vm879, %v651, 0.0
        %v912 = vsel %vm880, %v652, 0.0
        %v913 = vsel %vm881, %v653, 0.0
        %v914 = vsel %vm882, %v654, 0.0
        %v915 = vsel %vm883, %v655, 0.0
        %v916 = vsel %vm884, %v656, 0.0
        %v917 = vsel %vm885, %v657, 0.0
        %v918 = vsel %vm886, %v658, 0.0
        %v919 = vsel %vm887, %v659, 0.0
        %v920 = vsel %vm888, %v660, 0.0
        %v921 = vsel %vm889, %v661, 0.0
        %v922 = vsel %vm890, %v662, 0.0
        %v923 = vsel %vm891, %v663, 0.0
        %v924 = vsel %vm892, %v664, 0.0
        %v925 = vsel %vm893, %v665, 0.0
        %v926 = vsel %vm894, %v666, 0.0
        %v927 = vsel %vm895, %v667, 0.0
        %v928 = vsel %vm896, %v668, 0.0
        %v929 = vsel %vm897, %v669, 0.0
        %v930 = vsel %vm898, %v670, 0.0
        %v931 = vsel %vm899, %v671, 0.0
        %v932 = vsel %vm900, %v672, 0.0
        %v933 = vsel %vm901, %v673, 0.0
        %v934 = vsel %vm902, %v674, 0.0
        %v935 = vsel %vm903, %v675, 0.0
        %v936 = vsel %vm904, %v676, 0.0
        %v937 = vsel %vm905, %v677, 0.0
        %v938 = vsel %vm906, %v678, 0.0
        %v939 = vsel %vm907, %v679, 0.0
        %v940 = vsel %vm908, %v680, 0.0
        %v941 = vsel %vm909, %v681, 0.0
        %v942 = vsel %vm910, %v682, 0.0
        %v943 = vsel %vm513, %v911, 0.0
        %v944 = vsel %vm513, %v912, 0.0
        %v945 = vadd.f32 %v943, %v944
        %v946 = vsel %vm513, %v913, 0.0
        %v947 = vadd.f32 %v945, %v946
        %v948 = vsel %vm513, %v914, 0.0
        %v949 = vadd.f32 %v947, %v948
        %v950 = vsel %vm513, %v915, 0.0
        %v951 = vadd.f32 %v949, %v950
        %v952 = vsel %vm513, %v916, 0.0
        %v953 = vadd.f32 %v951, %v952
        %v954 = vsel %vm513, %v917, 0.0
        %v955 = vadd.f32 %v953, %v954
        %v956 = vsel %vm513, %v918, 0.0
        %v957 = vadd.f32 %v955, %v956
        %v958 = vsel %vm513, %v919, 0.0
        %v959 = vadd.f32 %v957, %v958
        %v960 = vsel %vm513, %v920, 0.0
        %v961 = vadd.f32 %v959, %v960
        %v962 = vsel %vm513, %v921, 0.0
        %v963 = vadd.f32 %v961, %v962
        %v964 = vsel %vm513, %v922, 0.0
        %v965 = vadd.f32 %v963, %v964
        %v966 = vsel %vm513, %v923, 0.0
        %v967 = vadd.f32 %v965, %v966
        %v968 = vsel %vm513, %v924, 0.0
        %v969 = vadd.f32 %v967, %v968
        %v970 = vsel %vm513, %v925, 0.0
        %v971 = vadd.f32 %v969, %v970
        %v972 = vsel %vm513, %v926, 0.0
        %v973 = vadd.f32 %v971, %v972
        %v974 = vsel %vm513, %v927, 0.0
        %v975 = vadd.f32 %v973, %v974
        %v976 = vsel %vm513, %v928, 0.0
        %v977 = vadd.f32 %v975, %v976
        %v978 = vsel %vm513, %v929, 0.0
        %v979 = vadd.f32 %v977, %v978
        %v980 = vsel %vm513, %v930, 0.0
        %v981 = vadd.f32 %v979, %v980
        %v982 = vsel %vm513, %v931, 0.0
        %v983 = vadd.f32 %v981, %v982
        %v984 = vsel %vm513, %v932, 0.0
        %v985 = vadd.f32 %v983, %v984
        %v986 = vsel %vm513, %v933, 0.0
        %v987 = vadd.f32 %v985, %v986
        %v988 = vsel %vm513, %v934, 0.0
        %v989 = vadd.f32 %v987, %v988
        %v990 = vsel %vm513, %v935, 0.0
        %v991 = vadd.f32 %v989, %v990
        %v992 = vsel %vm513, %v936, 0.0
        %v993 = vadd.f32 %v991, %v992
        %v994 = vsel %vm513, %v937, 0.0
        %v995 = vadd.f32 %v993, %v994
        %v996 = vsel %vm513, %v938, 0.0
        %v997 = vadd.f32 %v995, %v996
        %v998 = vsel %vm513, %v939, 0.0
        %v999 = vadd.f32 %v997, %v998
        %v1000 = vsel %vm513, %v940, 0.0
        %v1001 = vadd.f32 %v999, %v1000
        %v1002 = vsel %vm513, %v941, 0.0
        %v1003 = vadd.f32 %v1001, %v1002
        %v1004 = vsel %vm513, %v942, 0.0
        %v1005 = vadd.f32 %v1003, %v1004
        %v1006 = vrot.slane %v1005, 4
        %v1007 = vadd.f32 %v1005, %v1006
        %v1008 = vrot.slane %v1007, 2
        %v1009 = vadd.f32 %v1007, %v1008
        %v1010 = vrot.slane %v1009, 1
        %v1011 = vadd.f32 %v1009, %v1010
        %v1012 = vmul.f32 %v911, %v911
        %v1013 = vmul.f32 %v912, %v912
        %v1014 = vmul.f32 %v913, %v913
        %v1015 = vmul.f32 %v914, %v914
        %v1016 = vmul.f32 %v915, %v915
        %v1017 = vmul.f32 %v916, %v916
        %v1018 = vmul.f32 %v917, %v917
        %v1019 = vmul.f32 %v918, %v918
        %v1020 = vmul.f32 %v919, %v919
        %v1021 = vmul.f32 %v920, %v920
        %v1022 = vmul.f32 %v921, %v921
        %v1023 = vmul.f32 %v922, %v922
        %v1024 = vmul.f32 %v923, %v923
        %v1025 = vmul.f32 %v924, %v924
        %v1026 = vmul.f32 %v925, %v925
        %v1027 = vmul.f32 %v926, %v926
        %v1028 = vmul.f32 %v927, %v927
        %v1029 = vmul.f32 %v928, %v928
        %v1030 = vmul.f32 %v929, %v929
        %v1031 = vmul.f32 %v930, %v930
        %v1032 = vmul.f32 %v931, %v931
        %v1033 = vmul.f32 %v932, %v932
        %v1034 = vmul.f32 %v933, %v933
        %v1035 = vmul.f32 %v934, %v934
        %v1036 = vmul.f32 %v935, %v935
        %v1037 = vmul.f32 %v936, %v936
        %v1038 = vmul.f32 %v937, %v937
        %v1039 = vmul.f32 %v938, %v938
        %v1040 = vmul.f32 %v939, %v939
        %v1041 = vmul.f32 %v940, %v940
        %v1042 = vmul.f32 %v941, %v941
        %v1043 = vmul.f32 %v942, %v942
        %v1044 = vsel %vm513, %v1012, 0.0
        %v1045 = vsel %vm513, %v1013, 0.0
        %v1046 = vadd.f32 %v1044, %v1045
        %v1047 = vsel %vm513, %v1014, 0.0
        %v1048 = vadd.f32 %v1046, %v1047
        %v1049 = vsel %vm513, %v1015, 0.0
        %v1050 = vadd.f32 %v1048, %v1049
        %v1051 = vsel %vm513, %v1016, 0.0
        %v1052 = vadd.f32 %v1050, %v1051
        %v1053 = vsel %vm513, %v1017, 0.0
        %v1054 = vadd.f32 %v1052, %v1053
        %v1055 = vsel %vm513, %v1018, 0.0
        %v1056 = vadd.f32 %v1054, %v1055
        %v1057 = vsel %vm513, %v1019, 0.0
        %v1058 = vadd.f32 %v1056, %v1057
        %v1059 = vsel %vm513, %v1020, 0.0
        %v1060 = vadd.f32 %v1058, %v1059
        %v1061 = vsel %vm513, %v1021, 0.0
        %v1062 = vadd.f32 %v1060, %v1061
        %v1063 = vsel %vm513, %v1022, 0.0
        %v1064 = vadd.f32 %v1062, %v1063
        %v1065 = vsel %vm513, %v1023, 0.0
        %v1066 = vadd.f32 %v1064, %v1065
        %v1067 = vsel %vm513, %v1024, 0.0
        %v1068 = vadd.f32 %v1066, %v1067
        %v1069 = vsel %vm513, %v1025, 0.0
        %v1070 = vadd.f32 %v1068, %v1069
        %v1071 = vsel %vm513, %v1026, 0.0
        %v1072 = vadd.f32 %v1070, %v1071
        %v1073 = vsel %vm513, %v1027, 0.0
        %v1074 = vadd.f32 %v1072, %v1073
        %v1075 = vsel %vm513, %v1028, 0.0
        %v1076 = vadd.f32 %v1074, %v1075
        %v1077 = vsel %vm513, %v1029, 0.0
        %v1078 = vadd.f32 %v1076, %v1077
        %v1079 = vsel %vm513, %v1030, 0.0
        %v1080 = vadd.f32 %v1078, %v1079
        %v1081 = vsel %vm513, %v1031, 0.0
        %v1082 = vadd.f32 %v1080, %v1081
        %v1083 = vsel %vm513, %v1032, 0.0
        %v1084 = vadd.f32 %v1082, %v1083
        %v1085 = vsel %vm513, %v1033, 0.0
        %v1086 = vadd.f32 %v1084, %v1085
        %v1087 = vsel %vm513, %v1034, 0.0
        %v1088 = vadd.f32 %v1086, %v1087
        %v1089 = vsel %vm513, %v1035, 0.0
        %v1090 = vadd.f32 %v1088, %v1089
        %v1091 = vsel %vm513, %v1036, 0.0
        %v1092 = vadd.f32 %v1090, %v1091
        %v1093 = vsel %vm513, %v1037, 0.0
        %v1094 = vadd.f32 %v1092, %v1093
        %v1095 = vsel %vm513, %v1038, 0.0
        %v1096 = vadd.f32 %v1094, %v1095
        %v1097 = vsel %vm513, %v1039, 0.0
        %v1098 = vadd.f32 %v1096, %v1097
        %v1099 = vsel %vm513, %v1040, 0.0
        %v1100 = vadd.f32 %v1098, %v1099
        %v1101 = vsel %vm513, %v1041, 0.0
        %v1102 = vadd.f32 %v1100, %v1101
        %v1103 = vsel %vm513, %v1042, 0.0
        %v1104 = vadd.f32 %v1102, %v1103
        %v1105 = vsel %vm513, %v1043, 0.0
        %v1106 = vadd.f32 %v1104, %v1105
        %v1107 = vrot.slane %v1106, 4
        %v1108 = vadd.f32 %v1106, %v1107
        %v1109 = vrot.slane %v1108, 2
        %v1110 = vadd.f32 %v1108, %v1109
        %v1111 = vrot.slane %v1110, 1
        %v1112 = vadd.f32 %v1110, %v1111
        %v1113 = vld [vmem:[%s5] sm:$0x3]
        %vm1114 = vcmask 1040384
        %v1115 = vsel %vm1114, %v1011, %v1112
        %v1116 = vadd.f32 %v1113, %v1115
        %vm1117 = vcmask 123904
        %1118 = vst.msk [vmem:[%s5] sm:$0x3] %vm1117, %v1116
        %s1119 = sand.u32 %s114, 1
        %s1120 = sand.u32 %s114, 1
        %s1121 = smul.addr %s1120, 128
        %s1122 = scalar_lea.vmem [#allocation2], %s1121
        // Predicated region
        $region41: #{mlp_net_forward.2} parent=35 // pred_check
          %p1123 = pneg %p124
        $region42: #{mlp_net_forward.2} parent=35 // pred_check_branch
          %1125 = sbr.rel (%p1123) target = $region44
        $region43: #{mlp_net_forward.2} parent=35 // pred_region
          %s1126 = smul.u32 32, %s17
          %s1127 = ssub.s32 125, %s1126
          %p1128 = scmp.lt.s32.totalorder %s1127, 32
          %s1129 = scalar_select %p1128, %s1127, 32
          %s1130 = smul.u32 4, %s1129
          %p1131 = scmp.ne.s32.totalorder 0, %s1130
          %s1132 = smul.addr %s1126, 4
          %s1133 = scalar_lea.vmem %s4, %s1132
          // Predicated region
          $region45: #{mlp_net_forward.2} parent=43 // pred_check
            %p1134 = pneg %p1131
          $region46: #{mlp_net_forward.2} parent=43 // pred_check_branch
            %1136 = sbr.rel (%p1134) target = $region48
          $region47: #{mlp_net_forward.2} parent=43 // pred_region
            // Predicated region
            $region49: #{mlp_net_forward.2} parent=47 // pred_check
              _
            $region50: #{mlp_net_forward.2} parent=47 // pred_check_branch
              %1138 = sbr.rel target = $region52
            $region51: #{mlp_net_forward.2} parent=47 // pred_region
              // Predicated region
              $region71: #{mlp_net_forward.2} parent=51 // pred_check
                _
              $region72: #{mlp_net_forward.2} parent=51 // pred_check_branch
                %1250 = sbr.rel (0) target = $region74
              $region73: #{mlp_net_forward.2} parent=51 // pred_region
                %s1252 = ssub.s32 16, 1
                %s1253 = sshrl.u32 %s1129, 5
                // While loop
                $region75: #{mlp_net_forward.2} parent=73 // loop_pre_header
                  _
                $region76: #{mlp_net_forward.2} parent=73 // loop_header
                  %s1255 = sphi 0, %s1257
                  %p1256 = scmp.ge.s32.totalorder %s1255, %s1253
                  %s1260 = sphi 0, %s1329
                  %s1261 = sphi %s1122, %s1332
                  %s1262 = sphi %s1133, %s1333
                $region77: #{mlp_net_forward.2} parent=73 // loop_header_branch
                  %1259 = sbr.rel (%p1256) target = $region81
                $region78: #{mlp_net_forward.2} parent=73 // loop_body
                  %v1263 = vld [vmem:[%s1261] sm:%s1252]
                  %1264 = vst [vmem:[%s1262] sm:%s1252] %v1263
                  %v1265 = vld [vmem:[%s1261 + $0x4] sm:%s1252]
                  %1266 = vst [vmem:[%s1262 + $0x4] sm:%s1252] %v1265
                  %v1267 = vld [vmem:[%s1261 + $0x8] sm:%s1252]
                  %1268 = vst [vmem:[%s1262 + $0x8] sm:%s1252] %v1267
                  %v1269 = vld [vmem:[%s1261 + $0xc] sm:%s1252]
                  %1270 = vst [vmem:[%s1262 + $0xc] sm:%s1252] %v1269
                  %v1271 = vld [vmem:[%s1261 + $0x10] sm:%s1252]
                  %1272 = vst [vmem:[%s1262 + $0x10] sm:%s1252] %v1271
                  %v1273 = vld [vmem:[%s1261 + $0x14] sm:%s1252]
                  %1274 = vst [vmem:[%s1262 + $0x14] sm:%s1252] %v1273
                  %v1275 = vld [vmem:[%s1261 + $0x18] sm:%s1252]
                  %1276 = vst [vmem:[%s1262 + $0x18] sm:%s1252] %v1275
                  %v1277 = vld [vmem:[%s1261 + $0x1c] sm:%s1252]
                  %1278 = vst [vmem:[%s1262 + $0x1c] sm:%s1252] %v1277
                  %v1279 = vld [vmem:[%s1261 + $0x20] sm:%s1252]
                  %1280 = vst [vmem:[%s1262 + $0x20] sm:%s1252] %v1279
                  %v1281 = vld [vmem:[%s1261 + $0x24] sm:%s1252]
                  %1282 = vst [vmem:[%s1262 + $0x24] sm:%s1252] %v1281
                  %v1283 = vld [vmem:[%s1261 + $0x28] sm:%s1252]
                  %1284 = vst [vmem:[%s1262 + $0x28] sm:%s1252] %v1283
                  %v1285 = vld [vmem:[%s1261 + $0x2c] sm:%s1252]
                  %1286 = vst [vmem:[%s1262 + $0x2c] sm:%s1252] %v1285
                  %v1287 = vld [vmem:[%s1261 + $0x30] sm:%s1252]
                  %1288 = vst [vmem:[%s1262 + $0x30] sm:%s1252] %v1287
                  %v1289 = vld [vmem:[%s1261 + $0x34] sm:%s1252]
                  %1290 = vst [vmem:[%s1262 + $0x34] sm:%s1252] %v1289
                  %v1291 = vld [vmem:[%s1261 + $0x38] sm:%s1252]
                  %1292 = vst [vmem:[%s1262 + $0x38] sm:%s1252] %v1291
                  %v1293 = vld [vmem:[%s1261 + $0x3c] sm:%s1252]
                  %1294 = vst [vmem:[%s1262 + $0x3c] sm:%s1252] %v1293
                  %v1295 = vld [vmem:[%s1261 + $0x40] sm:%s1252]
                  %1296 = vst [vmem:[%s1262 + $0x40] sm:%s1252] %v1295
                  %v1297 = vld [vmem:[%s1261 + $0x44] sm:%s1252]
                  %1298 = vst [vmem:[%s1262 + $0x44] sm:%s1252] %v1297
                  %v1299 = vld [vmem:[%s1261 + $0x48] sm:%s1252]
                  %1300 = vst [vmem:[%s1262 + $0x48] sm:%s1252] %v1299
                  %v1301 = vld [vmem:[%s1261 + $0x4c] sm:%s1252]
                  %1302 = vst [vmem:[%s1262 + $0x4c] sm:%s1252] %v1301
                  %v1303 = vld [vmem:[%s1261 + $0x50] sm:%s1252]
                  %1304 = vst [vmem:[%s1262 + $0x50] sm:%s1252] %v1303
                  %v1305 = vld [vmem:[%s1261 + $0x54] sm:%s1252]
                  %1306 = vst [vmem:[%s1262 + $0x54] sm:%s1252] %v1305
                  %v1307 = vld [vmem:[%s1261 + $0x58] sm:%s1252]
                  %1308 = vst [vmem:[%s1262 + $0x58] sm:%s1252] %v1307
                  %v1309 = vld [vmem:[%s1261 + $0x5c] sm:%s1252]
                  %1310 = vst [vmem:[%s1262 + $0x5c] sm:%s1252] %v1309
                  %v1311 = vld [vmem:[%s1261 + $0x60] sm:%s1252]
                  %1312 = vst [vmem:[%s1262 + $0x60] sm:%s1252] %v1311
                  %v1313 = vld [vmem:[%s1261 + $0x64] sm:%s1252]
                  %1314 = vst [vmem:[%s1262 + $0x64] sm:%s1252] %v1313
                  %v1315 = vld [vmem:[%s1261 + $0x68] sm:%s1252]
                  %1316 = vst [vmem:[%s1262 + $0x68] sm:%s1252] %v1315
                  %v1317 = vld [vmem:[%s1261 + $0x6c] sm:%s1252]
                  %1318 = vst [vmem:[%s1262 + $0x6c] sm:%s1252] %v1317
                  %v1319 = vld [vmem:[%s1261 + $0x70] sm:%s1252]
                  %1320 = vst [vmem:[%s1262 + $0x70] sm:%s1252] %v1319
                  %v1321 = vld [vmem:[%s1261 + $0x74] sm:%s1252]
                  %1322 = vst [vmem:[%s1262 + $0x74] sm:%s1252] %v1321
                  %v1323 = vld [vmem:[%s1261 + $0x78] sm:%s1252]
                  %1324 = vst [vmem:[%s1262 + $0x78] sm:%s1252] %v1323
                  %v1325 = vld [vmem:[%s1261 + $0x7c] sm:%s1252]
                  %1326 = vst [vmem:[%s1262 + $0x7c] sm:%s1252] %v1325
                  %s1327 = sadd.s32 1, %s1260
                  %p1328 = scmp.ge.s32.totalorder %s1327, %s1253
                  %s1329 = scalar_select %p1328, 0, %s1327
                  %s1330 = smul.u32 %s1329, 128
                  %s1331 = smul.u32 %s1329, 128
                  %s1332 = scalar_lea.vmem %s1122, %s1330 [#allocation2]
                  %s1333 = scalar_lea.vmem %s1133, %s1331
                $region79: #{mlp_net_forward.2} parent=73 // loop_footer
                  %s1257 = sadd.s32 %s1255, 1
                $region80: #{mlp_net_forward.2} parent=73 // loop_footer_branch
                  %1254 = sbr.rel target = $region76
                $region81: #{mlp_net_forward.2} parent=73 // loop_exit
                  _
                %s1334 = sshrl.u32 %s1129, 5
                %s1335 = sand.u32 %s1129, 31
                %s1336 = smul.u32 %s1334, 32
                %s1337 = smul.u32 4, %s1336
                %s1338 = scalar_lea.vmem %s1122, %s1337 [#allocation2]
                %s1339 = smul.u32 4, %s1336
                %s1340 = scalar_lea.vmem %s1133, %s1339
                // While loop
                $region82: #{mlp_net_forward.2} parent=73 // loop_pre_header
                  _
                $region83: #{mlp_net_forward.2} parent=73 // loop_header
                  %s1342 = sphi 0, %s1344
                  %p1343 = scmp.ge.s32.totalorder %s1342, %s1335
                  %s1347 = sphi 0, %s1354
                  %s1348 = sphi %s1338, %s1357
                  %s1349 = sphi %s1340, %s1358
                $region84: #{mlp_net_forward.2} parent=73 // loop_header_branch
                  %1346 = sbr.rel (%p1343) target = $region88
                $region85: #{mlp_net_forward.2} parent=73 // loop_body
                  %v1350 = vld [vmem:[%s1348] sm:%s1252]
                  %1351 = vst [vmem:[%s1349] sm:%s1252] %v1350
                  %s1352 = sadd.s32 1, %s1347
                  %p1353 = scmp.ge.s32.totalorder %s1352, %s1335
                  %s1354 = scalar_select %p1353, 0, %s1352
                  %s1355 = smul.u32 %s1354, 4
                  %s1356 = smul.u32 %s1354, 4
                  %s1357 = scalar_lea.vmem %s1338, %s1355 [#allocation2]
                  %s1358 = scalar_lea.vmem %s1340, %s1356
                $region86: #{mlp_net_forward.2} parent=73 // loop_footer
                  %s1344 = sadd.s32 %s1342, 1
                $region87: #{mlp_net_forward.2} parent=73 // loop_footer_branch
                  %1341 = sbr.rel target = $region83
                $region88: #{mlp_net_forward.2} parent=73 // loop_exit
                  _
              $region74: #{mlp_net_forward.2} parent=51 // pred_fallthru
                _
            $region52: #{mlp_net_forward.2} parent=47 // pred_fallthru
              _
            // Predicated region
            $region53: #{mlp_net_forward.2} parent=47 // pred_check
              _
            $region54: #{mlp_net_forward.2} parent=47 // pred_check_branch
              %1140 = sbr.rel (0) target = $region56
            $region55: #{mlp_net_forward.2} parent=47 // pred_region
              %s1142 = ssub.s32 16, 1
              %s1143 = sshrl.u32 %s1129, 5
              // While loop
              $region57: #{mlp_net_forward.2} parent=55 // loop_pre_header
                _
              $region58: #{mlp_net_forward.2} parent=55 // loop_header
                %s1145 = sphi 0, %s1147
                %p1146 = scmp.ge.s32.totalorder %s1145, %s1143
                %s1150 = sphi 0, %s1219
                %s1151 = sphi %s1122, %s1222
                %s1152 = sphi %s1133, %s1223
              $region59: #{mlp_net_forward.2} parent=55 // loop_header_branch
                %1149 = sbr.rel (%p1146) target = $region63
              $region60: #{mlp_net_forward.2} parent=55 // loop_body
                %v1153 = vld [vmem:[%s1151] sm:%s1142]
                %1154 = vst [vmem:[%s1152] sm:%s1142] %v1153
                %v1155 = vld [vmem:[%s1151 + $0x4] sm:%s1142]
                %1156 = vst [vmem:[%s1152 + $0x4] sm:%s1142] %v1155
                %v1157 = vld [vmem:[%s1151 + $0x8] sm:%s1142]
                %1158 = vst [vmem:[%s1152 + $0x8] sm:%s1142] %v1157
                %v1159 = vld [vmem:[%s1151 + $0xc] sm:%s1142]
                %1160 = vst [vmem:[%s1152 + $0xc] sm:%s1142] %v1159
                %v1161 = vld [vmem:[%s1151 + $0x10] sm:%s1142]
                %1162 = vst [vmem:[%s1152 + $0x10] sm:%s1142] %v1161
                %v1163 = vld [vmem:[%s1151 + $0x14] sm:%s1142]
                %1164 = vst [vmem:[%s1152 + $0x14] sm:%s1142] %v1163
                %v1165 = vld [vmem:[%s1151 + $0x18] sm:%s1142]
                %1166 = vst [vmem:[%s1152 + $0x18] sm:%s1142] %v1165
                %v1167 = vld [vmem:[%s1151 + $0x1c] sm:%s1142]
                %1168 = vst [vmem:[%s1152 + $0x1c] sm:%s1142] %v1167
                %v1169 = vld [vmem:[%s1151 + $0x20] sm:%s1142]
                %1170 = vst [vmem:[%s1152 + $0x20] sm:%s1142] %v1169
                %v1171 = vld [vmem:[%s1151 + $0x24] sm:%s1142]
                %1172 = vst [vmem:[%s1152 + $0x24] sm:%s1142] %v1171
                %v1173 = vld [vmem:[%s1151 + $0x28] sm:%s1142]
                %1174 = vst [vmem:[%s1152 + $0x28] sm:%s1142] %v1173
                %v1175 = vld [vmem:[%s1151 + $0x2c] sm:%s1142]
                %1176 = vst [vmem:[%s1152 + $0x2c] sm:%s1142] %v1175
                %v1177 = vld [vmem:[%s1151 + $0x30] sm:%s1142]
                %1178 = vst [vmem:[%s1152 + $0x30] sm:%s1142] %v1177
                %v1179 = vld [vmem:[%s1151 + $0x34] sm:%s1142]
                %1180 = vst [vmem:[%s1152 + $0x34] sm:%s1142] %v1179
                %v1181 = vld [vmem:[%s1151 + $0x38] sm:%s1142]
                %1182 = vst [vmem:[%s1152 + $0x38] sm:%s1142] %v1181
                %v1183 = vld [vmem:[%s1151 + $0x3c] sm:%s1142]
                %1184 = vst [vmem:[%s1152 + $0x3c] sm:%s1142] %v1183
                %v1185 = vld [vmem:[%s1151 + $0x40] sm:%s1142]
                %1186 = vst [vmem:[%s1152 + $0x40] sm:%s1142] %v1185
                %v1187 = vld [vmem:[%s1151 + $0x44] sm:%s1142]
                %1188 = vst [vmem:[%s1152 + $0x44] sm:%s1142] %v1187
                %v1189 = vld [vmem:[%s1151 + $0x48] sm:%s1142]
                %1190 = vst [vmem:[%s1152 + $0x48] sm:%s1142] %v1189
                %v1191 = vld [vmem:[%s1151 + $0x4c] sm:%s1142]
                %1192 = vst [vmem:[%s1152 + $0x4c] sm:%s1142] %v1191
                %v1193 = vld [vmem:[%s1151 + $0x50] sm:%s1142]
                %1194 = vst [vmem:[%s1152 + $0x50] sm:%s1142] %v1193
                %v1195 = vld [vmem:[%s1151 + $0x54] sm:%s1142]
                %1196 = vst [vmem:[%s1152 + $0x54] sm:%s1142] %v1195
                %v1197 = vld [vmem:[%s1151 + $0x58] sm:%s1142]
                %1198 = vst [vmem:[%s1152 + $0x58] sm:%s1142] %v1197
                %v1199 = vld [vmem:[%s1151 + $0x5c] sm:%s1142]
                %1200 = vst [vmem:[%s1152 + $0x5c] sm:%s1142] %v1199
                %v1201 = vld [vmem:[%s1151 + $0x60] sm:%s1142]
                %1202 = vst [vmem:[%s1152 + $0x60] sm:%s1142] %v1201
                %v1203 = vld [vmem:[%s1151 + $0x64] sm:%s1142]
                %1204 = vst [vmem:[%s1152 + $0x64] sm:%s1142] %v1203
                %v1205 = vld [vmem:[%s1151 + $0x68] sm:%s1142]
                %1206 = vst [vmem:[%s1152 + $0x68] sm:%s1142] %v1205
                %v1207 = vld [vmem:[%s1151 + $0x6c] sm:%s1142]
                %1208 = vst [vmem:[%s1152 + $0x6c] sm:%s1142] %v1207
                %v1209 = vld [vmem:[%s1151 + $0x70] sm:%s1142]
                %1210 = vst [vmem:[%s1152 + $0x70] sm:%s1142] %v1209
                %v1211 = vld [vmem:[%s1151 + $0x74] sm:%s1142]
                %1212 = vst [vmem:[%s1152 + $0x74] sm:%s1142] %v1211
                %v1213 = vld [vmem:[%s1151 + $0x78] sm:%s1142]
                %1214 = vst [vmem:[%s1152 + $0x78] sm:%s1142] %v1213
                %v1215 = vld [vmem:[%s1151 + $0x7c] sm:%s1142]
                %1216 = vst [vmem:[%s1152 + $0x7c] sm:%s1142] %v1215
                %s1217 = sadd.s32 1, %s1150
                %p1218 = scmp.ge.s32.totalorder %s1217, %s1143
                %s1219 = scalar_select %p1218, 0, %s1217
                %s1220 = smul.u32 %s1219, 128
                %s1221 = smul.u32 %s1219, 128
                %s1222 = scalar_lea.vmem %s1122, %s1220 [#allocation2]
                %s1223 = scalar_lea.vmem %s1133, %s1221
              $region61: #{mlp_net_forward.2} parent=55 // loop_footer
                %s1147 = sadd.s32 %s1145, 1
              $region62: #{mlp_net_forward.2} parent=55 // loop_footer_branch
                %1144 = sbr.rel target = $region58
              $region63: #{mlp_net_forward.2} parent=55 // loop_exit
                _
              %s1224 = sshrl.u32 %s1129, 5
              %s1225 = sand.u32 %s1129, 31
              %s1226 = smul.u32 %s1224, 32
              %s1227 = smul.u32 4, %s1226
              %s1228 = scalar_lea.vmem %s1122, %s1227 [#allocation2]
              %s1229 = smul.u32 4, %s1226
              %s1230 = scalar_lea.vmem %s1133, %s1229
              // While loop
              $region64: #{mlp_net_forward.2} parent=55 // loop_pre_header
                _
              $region65: #{mlp_net_forward.2} parent=55 // loop_header
                %s1232 = sphi 0, %s1234
                %p1233 = scmp.ge.s32.totalorder %s1232, %s1225
                %s1237 = sphi 0, %s1244
                %s1238 = sphi %s1228, %s1247
                %s1239 = sphi %s1230, %s1248
              $region66: #{mlp_net_forward.2} parent=55 // loop_header_branch
                %1236 = sbr.rel (%p1233) target = $region70
              $region67: #{mlp_net_forward.2} parent=55 // loop_body
                %v1240 = vld [vmem:[%s1238] sm:%s1142]
                %1241 = vst [vmem:[%s1239] sm:%s1142] %v1240
                %s1242 = sadd.s32 1, %s1237
                %p1243 = scmp.ge.s32.totalorder %s1242, %s1225
                %s1244 = scalar_select %p1243, 0, %s1242
                %s1245 = smul.u32 %s1244, 4
                %s1246 = smul.u32 %s1244, 4
                %s1247 = scalar_lea.vmem %s1228, %s1245 [#allocation2]
                %s1248 = scalar_lea.vmem %s1230, %s1246
              $region68: #{mlp_net_forward.2} parent=55 // loop_footer
                %s1234 = sadd.s32 %s1232, 1
              $region69: #{mlp_net_forward.2} parent=55 // loop_footer_branch
                %1231 = sbr.rel target = $region65
              $region70: #{mlp_net_forward.2} parent=55 // loop_exit
                _
            $region56: #{mlp_net_forward.2} parent=47 // pred_fallthru
              _
          $region48: #{mlp_net_forward.2} parent=43 // pred_fallthru
            _
          %1359 = vnop
        $region44: #{mlp_net_forward.2} parent=35 // pred_fallthru
          _
        // Predicated region
        $region89: #{mlp_net_forward.2} parent=35 // pred_check
          %p1360 = pneg %p145
        $region90: #{mlp_net_forward.2} parent=35 // pred_check_branch
          %1362 = sbr.rel (%p1360) target = $region92
        $region91: #{mlp_net_forward.2} parent=35 // pred_region
          _
        $region92: #{mlp_net_forward.2} parent=35 // pred_fallthru
          _
        // Predicated region
        $region93: #{mlp_net_forward.2} parent=35 // pred_check
          %p1363 = pneg %p145
        $region94: #{mlp_net_forward.2} parent=35 // pred_check_branch
          %1365 = sbr.rel (%p1363) target = $region96
        $region95: #{mlp_net_forward.2} parent=35 // pred_region
          _
        $region96: #{mlp_net_forward.2} parent=35 // pred_fallthru
          _
      $region36: #{mlp_net_forward.2} parent=5 // pred_fallthru
        _
      %p1366 = scmp.le.s32.totalorder 2, %s12
      // Predicated region
      $region97: #{mlp_net_forward.2} parent=5 // pred_check
        %p1367 = pneg %p1366
      $region98: #{mlp_net_forward.2} parent=5 // pred_check_branch
        %1369 = sbr.rel (%p1367) target = $region100
      $region99: #{mlp_net_forward.2} parent=5 // pred_region
        %s1370 = ssub.s32 %s12, 2
        // Predicated region
        $region101: #{mlp_net_forward.2} parent=99 // pred_check
          %p1371 = pneg %p130
        $region102: #{mlp_net_forward.2} parent=99 // pred_check_branch
          %1373 = sbr.rel (%p1371) target = $region104
        $region103: #{mlp_net_forward.2} parent=99 // pred_region
          %s1374 = sand.u32 %s115, 1
          %s1375 = sand.u32 %s115, 1
          %s1376 = smul.addr %s1375, 128
          %s1377 = scalar_lea.vmem [#allocation2], %s1376
        $region104: #{mlp_net_forward.2} parent=99 // pred_fallthru
          _
      $region100: #{mlp_net_forward.2} parent=5 // pred_fallthru
        _
    $region6: #{mlp_net_forward.2} parent=1 // loop_footer
      %s16 = sadd.s32 1, %s12
    $region7: #{mlp_net_forward.2} parent=1 // loop_footer_branch
      %11 = sbr.rel target = $region3
    $region8: #{mlp_net_forward.2} parent=1 // loop_exit
      _

</llo_original>
